<compile_context>
chip_gen: v5e
topology: v5e:2x2
jax: 0.10.0
libtpu: 0.0.40
codegen_flags: <defaults>
</compile_context>

<pallas_src>
import functools

import jax
import jax.numpy as jnp
from jax import lax
from jax.experimental import pallas as pl
from jax.experimental.pallas import tpu as pltpu


def coattention_kernel(a_ref, b_ref, wa_ref, ba_ref, wb_ref, bb_ref,
                       ib_ref, ia_ref, attn_ref, *, La, Lb):
    BB, Lap, dim = a_ref.shape
    _, Lbp, _ = b_ref.shape
    kp = wa_ref.shape[1]
    mm_dtype = wa_ref.dtype            # weights pre-cast in the wrapper

    a3 = a_ref[...]                    # (BB, Lap, dim) f32
    b3 = b_ref[...]                    # (BB, Lbp, dim) f32
    ba = ba_ref[...]                   # (1, kp) f32
    bb = bb_ref[...]                   # (1, kp) f32
    wa = wa_ref[...]                   # (dim, kp) mm_dtype
    wb = wb_ref[...]                   # (dim, kp) mm_dtype

    # --- Fused linears: one large 2-D matmul per input (all BB batches at once).
    a2 = a3.reshape(BB * Lap, dim).astype(mm_dtype)
    b2 = b3.reshape(BB * Lbp, dim).astype(mm_dtype)
    ha = jnp.maximum(
        jnp.dot(a2, wa, preferred_element_type=jnp.float32) + ba, 0.0)  # (BB*Lap, kp)
    hb = jnp.maximum(
        jnp.dot(b2, wb, preferred_element_type=jnp.float32) + bb, 0.0)  # (BB*Lbp, kp)

    # Zero out padded sequence rows (sequence padded to a multiple of 8 in the
    # wrapper) so they are inert in the contraction and the means.
    if Lap != La:
        row_a = lax.broadcasted_iota(jnp.int32, (BB * Lap, 1), 0) % Lap
        ha = jnp.where(row_a < La, ha, 0.0)
    if Lbp != Lb:
        row_b = lax.broadcasted_iota(jnp.int32, (BB * Lbp, 1), 0) % Lbp
        hb = jnp.where(row_b < Lb, hb, 0.0)

    # --- attention_matrix = ha @ hb^T per batch (contract kp on the MXU).
    ha3 = ha.reshape(BB, Lap, kp).astype(mm_dtype)
    hb3 = hb.reshape(BB, Lbp, kp).astype(mm_dtype)
    attn = lax.dot_general(ha3, hb3, (((2,), (2,)), ((0,), (0,))),
                           preferred_element_type=jnp.float32)          # (BB, Lap, Lbp)
    attn_ref[...] = attn.astype(attn_ref.dtype)

    neg_inf = jnp.float32(-jnp.inf)

    # --- weights_proteins: mean over La (sublane reduce on VPU/XLU, no MXU),
    #     softmax over Lb (last-axis lane softmax).
    wp = jnp.sum(attn, axis=1) * jnp.float32(1.0 / La)                  # (BB, Lbp)
    if Lbp != Lb:
        col_b = lax.broadcasted_iota(jnp.int32, (BB, Lbp), 1)
        wp = jnp.where(col_b < Lb, wp, neg_inf)
    wp = wp - jnp.max(wp, axis=-1, keepdims=True)
    wp = jnp.exp(wp)
    wp = wp / jnp.sum(wp, axis=-1, keepdims=True)

    # interactions_a = sum_j wp[:, j] * b[:, j, :]   (VPU broadcast-mul + reduce)
    ia_ref[...] = jnp.sum(wp[:, :, None] * b3, axis=1).astype(ia_ref.dtype)

    # --- weights_compounds: mean over Lb (lane reduce), softmax over La (lanes).
    wc = jnp.sum(attn, axis=2) * jnp.float32(1.0 / Lb)                  # (BB, Lap)
    if Lap != La:
        col_a = lax.broadcasted_iota(jnp.int32, (BB, Lap), 1)
        wc = jnp.where(col_a < La, wc, neg_inf)
    wc = wc - jnp.max(wc, axis=-1, keepdims=True)
    wc = jnp.exp(wc)
    wc = wc / jnp.sum(wc, axis=-1, keepdims=True)

    # interactions_b = sum_i wc[:, i] * a[:, i, :]
    ib_ref[...] = jnp.sum(wc[:, :, None] * a3, axis=1).astype(ib_ref.dtype)


def coattention(a, b, wa, ba, wb, bb, *, block_b=None, use_bf16=False):
    """Pallas Coattention forward.

    a: (B, La, dim), b: (B, Lb, dim)
    wa, wb: (dim, k)   ba, bb: (k,)
    Returns (interactions_b (B,dim), interactions_a (B,dim),
             attention_matrix (B,La,Lb), attn_loss)
    """
    B, La, dim = a.shape
    _, Lb, _ = b.shape
    k = wa.shape[1]

    LANE, SUB = 128, 8

    # ---- Pad hidden dim k to a lane multiple: zero columns are inert through
    #      relu and the k-contraction.
    kp = int(pl.cdiv(k, LANE)) * LANE
    if kp != k:
        wa = jnp.pad(wa, ((0, 0), (0, kp - k)))
        wb = jnp.pad(wb, ((0, 0), (0, kp - k)))
        ba = jnp.pad(ba, (0, kp - k))
        bb = jnp.pad(bb, (0, kp - k))

    # ---- Pad La / Lb to multiples of 8 so in-kernel reshapes are layout-free.
    #      Padded rows are masked to zero inside the kernel.
    Lap = int(pl.cdiv(La, SUB)) * SUB
    Lbp = int(pl.cdiv(Lb, SUB)) * SUB
    if Lap != La:
        a = jnp.pad(a, ((0, 0), (0, Lap - La), (0, 0)))
    if Lbp != Lb:
        b = jnp.pad(b, ((0, 0), (0, Lbp - Lb), (0, 0)))

    # ---- Pre-cast weights for the MXU (bf16 is the fast path on v5e/v6e/v7x).
    w_dtype = jnp.bfloat16 if use_bf16 else jnp.float32
    wa = wa.astype(w_dtype)
    wb = wb.astype(w_dtype)
    ba2 = ba.reshape(1, kp).astype(jnp.float32)
    bb2 = bb.reshape(1, kp).astype(jnp.float32)

    # ---- Generation-aware VMEM budget / TensorCore count.
    try:
        vmem_cap = int(pltpu.get_tpu_info().vmem_capacity_bytes)
    except Exception:
        vmem_cap = 64 << 20
    kind = ""
    try:
        kind = jax.devices()[0].device_kind.lower()
    except Exception:
        pass
    two_tc = "v7" in kind                     # v7x: 2 TensorCores per chip
    small_vmem = vmem_cap <= (64 << 20)       # v7x-like (64 MiB/TC)
    if small_vmem:
        budget, vmem_ceiling, block_cap = 24 << 20, 48 << 20, 32
    else:
        budget, vmem_ceiling, block_cap = 80 << 20, 100 << 20, 128

    # ---- Size the batch block for VMEM (I/O blocks double-buffered; ha/hb and
    #      broadcast-product temporaries accounted for).
    f32b = 4
    w_el = 2 if use_bf16 else 4
    weight_resident = 2 * (2 * dim * kp * w_el + 2 * kp * f32b)   # worst case 2x buffered
    io_per_batch = f32b * (Lap * dim + Lbp * dim + Lap * Lbp + 2 * dim)
    act_per_batch = f32b * (Lap + Lbp) * kp
    if use_bf16:
        act_per_batch += 2 * (Lap + Lbp) * (kp + dim)
    per_batch_working = (2 * io_per_batch + 2 * act_per_batch
                         + f32b * (Lap + Lbp) * dim)

    if block_b is None:
        fit = max(1, (budget - weight_resident) // max(1, per_batch_working))
        block_b = int(min(block_cap, fit, max(B, 1)))
        if two_tc and B >= 16:
            block_b = int(min(block_b, pl.cdiv(B, 2)))
    block_b = int(max(1, block_b))
    # When the grid has >1 step, the 2-D (Bp, dim) output blocks need a
    # sublane-aligned leading block dim.
    if block_b < B and block_b % SUB != 0:
        block_b = int(pl.cdiv(block_b, SUB)) * SUB

    grid = int(pl.cdiv(B, block_b))
    if two_tc and grid > 1 and grid % 2 == 1:
        grid += 1            # equal step counts on both v7x TensorCores
    Bp = grid * block_b
    if Bp != B:              # padded batch rows are finite and sliced off
        a = jnp.pad(a, ((0, Bp - B), (0, 0), (0, 0)))
        b = jnp.pad(b, ((0, Bp - B), (0, 0), (0, 0)))

    vmem_limit = int(min(max(32 << 20,
                             weight_resident + block_b * per_batch_working
                             + (8 << 20)),
                         vmem_ceiling))

    out_shapes = (
        jax.ShapeDtypeStruct((Bp, dim), jnp.float32),        # interactions_b
        jax.ShapeDtypeStruct((Bp, dim), jnp.float32),        # interactions_a
        jax.ShapeDtypeStruct((Bp, Lap, Lbp), jnp.float32),   # attention_matrix
    )

    kernel_fn = functools.partial(coattention_kernel, La=La, Lb=Lb)

    a_spec = pl.BlockSpec((block_b, Lap, dim), lambda i: (i, 0, 0))
    b_spec = pl.BlockSpec((block_b, Lbp, dim), lambda i: (i, 0, 0))
    out_specs = [
        pl.BlockSpec((block_b, dim), lambda i: (i, 0)),            # ib (lane-dense)
        pl.BlockSpec((block_b, dim), lambda i: (i, 0)),            # ia (lane-dense)
        pl.BlockSpec((block_b, Lap, Lbp), lambda i: (i, 0, 0)),    # attn block
    ]

    def _run(single_buffer_weights):
        def wspec(shape):
            idx = lambda i, _n=len(shape): (0,) * _n
            if single_buffer_weights:
                try:
                    # Grid-invariant operands: double-buffering buys nothing.
                    return pl.BlockSpec(shape, idx, pipeline_mode=pl.Buffered(1))
                except TypeError:
                    pass
            return pl.BlockSpec(shape, idx)

        grid_spec = pltpu.PrefetchScalarGridSpec(
            num_scalar_prefetch=0,
            grid=(grid,),
            in_specs=[a_spec, b_spec,
                      wspec((dim, kp)), wspec((1, kp)),
                      wspec((dim, kp)), wspec((1, kp))],
            out_specs=out_specs,
        )
        return pl.pallas_call(
            kernel_fn,
            out_shape=out_shapes,
            grid_spec=grid_spec,
            compiler_params=pltpu.CompilerParams(
                dimension_semantics=("parallel",),
                vmem_limit_bytes=vmem_limit,
            ),
        )(a, b, wa, ba2, wb, bb2)

    try:
        ib, ia, attn = _run(True)
    except Exception:
        # Fallback if single-buffered weight specs are unsupported on this jax.
        ib, ia, attn = _run(False)

    ib = ib[:B]
    ia = ia[:B]
    attn = attn[:B, :La, :Lb]

    # TODO(synk): stable_kl(weights_compounds, pertubation_attention) is not
    # defined in the reference snippet; this implements the
    # pertubation_attention=None path (attn_loss == 0).
    attn_loss = 0.0
    return ib, ia, attn, attn_loss


def coattention_ref(a, b, wa, ba, wb, bb):
    """Pure-JAX reference matching the PyTorch semantics."""
    ha = jax.nn.relu(jnp.einsum("bld,dk->blk", a, wa) + ba)
    hb = jax.nn.relu(jnp.einsum("bld,dk->blk", b, wb) + bb)
    attn = jnp.einsum("bik,bjk->bij", ha, hb)
    wp = jax.nn.softmax(jnp.mean(attn, axis=1, keepdims=True), axis=-1)  # (B,1,Lb)
    wc = jax.nn.softmax(jnp.mean(attn, axis=2, keepdims=True), axis=1)   # (B,La,1)
    ia = jnp.matmul(wp, b)                                               # (B,1,dim)
    ib = jnp.matmul(jnp.swapaxes(wc, 1, 2), a)                           # (B,1,dim)
    return ib[:, 0, :], ia[:, 0, :], attn, 0.0


def _make_inputs(key, B, La, Lb, dim, k):
    ka, kb, kwa, kba, kwb, kbb = jax.random.split(key, 6)
    a = jax.random.normal(ka, (B, La, dim), dtype=jnp.float32)
    b = jax.random.normal(kb, (B, Lb, dim), dtype=jnp.float32)
    bound = 1.0 / (dim ** 0.5)   # nn.Linear-style uniform init, pre-transposed (dim, k)
    wa = jax.random.uniform(kwa, (dim, k), jnp.float32, -bound, bound)
    ba = jax.random.uniform(kba, (k,), jnp.float32, -bound, bound)
    wb = jax.random.uniform(kwb, (dim, k), jnp.float32, -bound, bound)
    bb = jax.random.uniform(kbb, (k,), jnp.float32, -bound, bound)
    return a, b, wa, ba, wb, bb


if __name__ == "__main__":
    key = jax.random.PRNGKey(0)
    k1, k2, k3 = jax.random.split(key, 3)

    # ---- test 1: small demo shapes (B=2, La=16, Lb=8, dim=32, k=16), f32
    a, b, wa, ba, wb, bb = _make_inputs(k1, 2, 16, 8, 32, 16)
    ib_o, ia_o, attn_o, _ = coattention(a, b, wa, ba, wb, bb)
    jax.block_until_ready((ib_o, ia_o, attn_o))
    ib_r, ia_r, attn_r, _ = coattention_ref(a, b, wa, ba, wb, bb)
    assert jnp.allclose(ib_o, ib_r, atol=1e-5, rtol=1e-5)
    assert jnp.allclose(ia_o, ia_r, atol=1e-5, rtol=1e-5)
    assert jnp.allclose(attn_o, attn_r, atol=1e-4, rtol=1e-4)

    # ---- test 2: larger batch, single grid step, f32
    a, b, wa, ba, wb, bb = _make_inputs(k2, 5, 24, 16, 32, 16)
    ib_o, ia_o, attn_o, _ = coattention(a, b, wa, ba, wb, bb)
    jax.block_until_ready((ib_o, ia_o, attn_o))
    ib_r, ia_r, attn_r, _ = coattention_ref(a, b, wa, ba, wb, bb)
    assert jnp.allclose(ib_o, ib_r, atol=1e-5, rtol=1e-5)
    assert jnp.allclose(ia_o, ia_r, atol=1e-5, rtol=1e-5)
    assert jnp.allclose(attn_o, attn_r, atol=1e-4, rtol=1e-4)

    # ---- test 3: bf16 MXU operands (fast path on all generations), f32 accum
    ib_o, ia_o, attn_o, _ = coattention(a, b, wa, ba, wb, bb, use_bf16=True)
    jax.block_until_ready((ib_o, ia_o, attn_o))
    assert jnp.allclose(attn_o, attn_r, atol=1e-1, rtol=5e-2)
    assert jnp.allclose(ib_o, ib_r, atol=5e-2, rtol=5e-2)
    assert jnp.allclose(ia_o, ia_r, atol=5e-2, rtol=5e-2)

    # ---- test 4: multi-block grid + unaligned La/Lb/k (exercises sequence
    #      padding/masking, batch padding, and block_b sublane alignment), f32
    a, b, wa, ba, wb, bb = _make_inputs(k3, 19, 13, 7, 32, 40)
    ib_o, ia_o, attn_o, _ = coattention(a, b, wa, ba, wb, bb, block_b=6)
    jax.block_until_ready((ib_o, ia_o, attn_o))
    ib_r, ia_r, attn_r, _ = coattention_ref(a, b, wa, ba, wb, bb)
    assert jnp.allclose(ib_o, ib_r, atol=1e-5, rtol=1e-5)
    assert jnp.allclose(ia_o, ia_r, atol=1e-5, rtol=1e-5)
    assert jnp.allclose(attn_o, attn_r, atol=1e-4, rtol=1e-4)

    print("KERNEL_OK")
</pallas_src>

<mosaic_0001>
module attributes {stable_mosaic.version = 11 : i64} {
  func.func @coattention_kernel(%arg0: i32, %arg1: memref<2x16x32xf32, #tpu.memory_space<vmem>>, %arg2: memref<2x8x32xf32, #tpu.memory_space<vmem>>, %arg3: memref<32x128xf32, #tpu.memory_space<vmem>>, %arg4: memref<1x128xf32, #tpu.memory_space<vmem>>, %arg5: memref<32x128xf32, #tpu.memory_space<vmem>>, %arg6: memref<1x128xf32, #tpu.memory_space<vmem>>, %arg7: memref<2x32xf32, #tpu.memory_space<vmem>>, %arg8: memref<2x32xf32, #tpu.memory_space<vmem>>, %arg9: memref<2x16x8xf32, #tpu.memory_space<vmem>>) attributes {dimension_semantics = [#tpu.dimension_semantics<parallel>], iteration_bounds = array<i64: 1>, scalar_prefetch = 0 : i64, scratch_operands = 0 : i64, tpu.core_type = #tpu.core_type<tc>, window_params = [{transform_indices = @transform_0, window_bounds = array<i64: 2, 16, 32>}, {transform_indices = @transform_1, window_bounds = array<i64: 2, 8, 32>}, {pipeline_mode = #tpu.pipeline_mode<synchronous>, transform_indices = @transform_2, window_bounds = array<i64: 32, 128>}, {pipeline_mode = #tpu.pipeline_mode<synchronous>, transform_indices = @transform_3, window_bounds = array<i64: 1, 128>}, {pipeline_mode = #tpu.pipeline_mode<synchronous>, transform_indices = @transform_4, window_bounds = array<i64: 32, 128>}, {pipeline_mode = #tpu.pipeline_mode<synchronous>, transform_indices = @transform_5, window_bounds = array<i64: 1, 128>}, {transform_indices = @transform_6, window_bounds = array<i64: 2, 32>}, {transform_indices = @transform_7, window_bounds = array<i64: 2, 32>}, {transform_indices = @transform_8, window_bounds = array<i64: 2, 16, 8>}]} {
    %c0 = arith.constant 0 : index
    %c0_0 = arith.constant 0 : index
    %c0_1 = arith.constant 0 : index
    %0 = vector.load %arg1[%c0, %c0_0, %c0_1] : memref<2x16x32xf32, #tpu.memory_space<vmem>>, vector<2x16x32xf32>
    %c0_2 = arith.constant 0 : index
    %c0_3 = arith.constant 0 : index
    %c0_4 = arith.constant 0 : index
    %1 = vector.load %arg2[%c0_2, %c0_3, %c0_4] : memref<2x8x32xf32, #tpu.memory_space<vmem>>, vector<2x8x32xf32>
    %c0_5 = arith.constant 0 : index
    %c0_6 = arith.constant 0 : index
    %2 = vector.load %arg4[%c0_5, %c0_6] : memref<1x128xf32, #tpu.memory_space<vmem>>, vector<1x128xf32>
    %c0_7 = arith.constant 0 : index
    %c0_8 = arith.constant 0 : index
    %3 = vector.load %arg6[%c0_7, %c0_8] : memref<1x128xf32, #tpu.memory_space<vmem>>, vector<1x128xf32>
    %c0_9 = arith.constant 0 : index
    %c0_10 = arith.constant 0 : index
    %4 = vector.load %arg3[%c0_9, %c0_10] : memref<32x128xf32, #tpu.memory_space<vmem>>, vector<32x128xf32>
    %c0_11 = arith.constant 0 : index
    %c0_12 = arith.constant 0 : index
    %5 = vector.load %arg5[%c0_11, %c0_12] : memref<32x128xf32, #tpu.memory_space<vmem>>, vector<32x128xf32>
    %6 = vector.shape_cast %0 : vector<2x16x32xf32> to vector<32x32xf32>
    %7 = vector.shape_cast %1 : vector<2x8x32xf32> to vector<16x32xf32>
    %cst = arith.constant dense<0.000000e+00> : vector<32x128xf32>
    %8 = tpu.matmul %6, %4, %cst {dimension_numbers = #tpu.dot_dimension_numbers<[1], [0], [0], [1], [0, 0, 1, 1], [], []>} : vector<32x32xf32>, vector<32x128xf32>, vector<32x128xf32> -> vector<32x128xf32>
    %9 = vector.broadcast %2 : vector<1x128xf32> to vector<32x128xf32>
    %10 = arith.addf %8, %9 : vector<32x128xf32>
    %cst_13 = arith.constant 0.000000e+00 : f32
    %11 = vector.broadcast %cst_13 : f32 to vector<32x128xf32>
    %12 = arith.maximumf %10, %11 : vector<32x128xf32>
    %cst_14 = arith.constant dense<0.000000e+00> : vector<16x128xf32>
    %13 = tpu.matmul %7, %5, %cst_14 {dimension_numbers = #tpu.dot_dimension_numbers<[1], [0], [0], [1], [0, 0, 1, 1], [], []>} : vector<16x32xf32>, vector<32x128xf32>, vector<16x128xf32> -> vector<16x128xf32>
    %14 = vector.broadcast %3 : vector<1x128xf32> to vector<16x128xf32>
    %15 = arith.addf %13, %14 : vector<16x128xf32>
    %cst_15 = arith.constant 0.000000e+00 : f32
    %16 = vector.broadcast %cst_15 : f32 to vector<16x128xf32>
    %17 = arith.maximumf %15, %16 : vector<16x128xf32>
    %18 = vector.shape_cast %12 : vector<32x128xf32> to vector<2x16x128xf32>
    %19 = vector.shape_cast %17 : vector<16x128xf32> to vector<2x8x128xf32>
    %cst_16 = arith.constant dense<0.000000e+00> : vector<2x16x8xf32>
    %20 = tpu.matmul %18, %19, %cst_16 {dimension_numbers = #tpu.dot_dimension_numbers<[2], [2], [1], [1], [0, 0, 0, 1, 1, 1], [0], [0]>} : vector<2x16x128xf32>, vector<2x8x128xf32>, vector<2x16x8xf32> -> vector<2x16x8xf32>
    %c0_17 = arith.constant 0 : index
    %c0_18 = arith.constant 0 : index
    %c0_19 = arith.constant 0 : index
    %21 = vector.load %arg9[%c0_17, %c0_18, %c0_19] : memref<2x16x8xf32, #tpu.memory_space<vmem>>, vector<2x16x8xf32>
    tpu.vector_store %arg9[%c0_17, %c0_18, %c0_19], %20 {strides = array<i32>} : memref<2x16x8xf32, #tpu.memory_space<vmem>>, vector<2x16x8xf32>,
    %cst_20 = arith.constant dense<0.000000e+00> : vector<2x8xf32>
    %22 = vector.multi_reduction <add>, %20, %cst_20 [1] : vector<2x16x8xf32> to vector<2x8xf32>
    %cst_21 = arith.constant 6.250000e-02 : f32
    %23 = vector.broadcast %cst_21 : f32 to vector<2x8xf32>
    %24 = arith.mulf %22, %23 : vector<2x8xf32>
    %cst_22 = arith.constant dense<0xFF800000> : vector<2xf32>
    %25 = vector.multi_reduction <maximumf>, %24, %cst_22 [1] : vector<2x8xf32> to vector<2xf32>
    %26 = vector.shape_cast %25 : vector<2xf32> to vector<2x1xf32>
    %27 = vector.broadcast %26 : vector<2x1xf32> to vector<2x8xf32>
    %28 = arith.subf %24, %27 : vector<2x8xf32>
    %29 = math.exp %28 : vector<2x8xf32>
    %cst_23 = arith.constant dense<0.000000e+00> : vector<2xf32>
    %30 = vector.multi_reduction <add>, %29, %cst_23 [1] : vector<2x8xf32> to vector<2xf32>
    %31 = vector.shape_cast %30 : vector<2xf32> to vector<2x1xf32>
    %32 = vector.broadcast %31 : vector<2x1xf32> to vector<2x8xf32>
    %33 = arith.divf %29, %32 : vector<2x8xf32>
    %34 = vector.shape_cast %33 : vector<2x8xf32> to vector<2x8x1xf32>
    %35 = vector.broadcast %34 : vector<2x8x1xf32> to vector<2x8x32xf32>
    %36 = arith.mulf %35, %1 : vector<2x8x32xf32>
    %cst_24 = arith.constant dense<0.000000e+00> : vector<2x32xf32>
    %37 = vector.multi_reduction <add>, %36, %cst_24 [1] : vector<2x8x32xf32> to vector<2x32xf32>
    %c0_25 = arith.constant 0 : index
    %c0_26 = arith.constant 0 : index
    %38 = vector.load %arg8[%c0_25, %c0_26] : memref<2x32xf32, #tpu.memory_space<vmem>>, vector<2x32xf32>
    tpu.vector_store %arg8[%c0_25, %c0_26], %37 {strides = array<i32>} : memref<2x32xf32, #tpu.memory_space<vmem>>, vector<2x32xf32>,
    %cst_27 = arith.constant dense<0.000000e+00> : vector<2x16xf32>
    %39 = vector.multi_reduction <add>, %20, %cst_27 [2] : vector<2x16x8xf32> to vector<2x16xf32>
    %cst_28 = arith.constant 1.250000e-01 : f32
    %40 = vector.broadcast %cst_28 : f32 to vector<2x16xf32>
    %41 = arith.mulf %39, %40 : vector<2x16xf32>
    %cst_29 = arith.constant dense<0xFF800000> : vector<2xf32>
    %42 = vector.multi_reduction <maximumf>, %41, %cst_29 [1] : vector<2x16xf32> to vector<2xf32>
    %43 = vector.shape_cast %42 : vector<2xf32> to vector<2x1xf32>
    %44 = vector.broadcast %43 : vector<2x1xf32> to vector<2x16xf32>
    %45 = arith.subf %41, %44 : vector<2x16xf32>
    %46 = math.exp %45 : vector<2x16xf32>
    %cst_30 = arith.constant dense<0.000000e+00> : vector<2xf32>
    %47 = vector.multi_reduction <add>, %46, %cst_30 [1] : vector<2x16xf32> to vector<2xf32>
    %48 = vector.shape_cast %47 : vector<2xf32> to vector<2x1xf32>
    %49 = vector.broadcast %48 : vector<2x1xf32> to vector<2x16xf32>
    %50 = arith.divf %46, %49 : vector<2x16xf32>
    %51 = vector.shape_cast %50 : vector<2x16xf32> to vector<2x16x1xf32>
    %52 = vector.broadcast %51 : vector<2x16x1xf32> to vector<2x16x32xf32>
    %53 = arith.mulf %52, %0 : vector<2x16x32xf32>
    %cst_31 = arith.constant dense<0.000000e+00> : vector<2x32xf32>
    %54 = vector.multi_reduction <add>, %53, %cst_31 [1] : vector<2x16x32xf32> to vector<2x32xf32>
    %c0_32 = arith.constant 0 : index
    %c0_33 = arith.constant 0 : index
    %55 = vector.load %arg7[%c0_32, %c0_33] : memref<2x32xf32, #tpu.memory_space<vmem>>, vector<2x32xf32>
    tpu.vector_store %arg7[%c0_32, %c0_33], %54 {strides = array<i32>} : memref<2x32xf32, #tpu.memory_space<vmem>>, vector<2x32xf32>,
    return
  }
  func.func @transform_0(%arg0: i32) -> (i32, i32, i32) {
    %c0_i32 = arith.constant 0 : i32
    %c0_i32_0 = arith.constant 0 : i32
    %c0_i32_1 = arith.constant 0 : i32
    return %arg0, %c0_i32, %c0_i32_0 : i32, i32, i32
  }
  func.func @transform_1(%arg0: i32) -> (i32, i32, i32) {
    %c0_i32 = arith.constant 0 : i32
    %c0_i32_0 = arith.constant 0 : i32
    %c0_i32_1 = arith.constant 0 : i32
    return %arg0, %c0_i32, %c0_i32_0 : i32, i32, i32
  }
  func.func @transform_2(%arg0: i32) -> (i32, i32) {
    %c0_i32 = arith.constant 0 : i32
    %c0_i32_0 = arith.constant 0 : i32
    %c0_i32_1 = arith.constant 0 : i32
    return %c0_i32, %c0_i32_0 : i32, i32
  }
  func.func @transform_3(%arg0: i32) -> (i32, i32) {
    %c0_i32 = arith.constant 0 : i32
    %c0_i32_0 = arith.constant 0 : i32
    %c0_i32_1 = arith.constant 0 : i32
    return %c0_i32, %c0_i32_0 : i32, i32
  }
  func.func @transform_4(%arg0: i32) -> (i32, i32) {
    %c0_i32 = arith.constant 0 : i32
    %c0_i32_0 = arith.constant 0 : i32
    %c0_i32_1 = arith.constant 0 : i32
    return %c0_i32, %c0_i32_0 : i32, i32
  }
  func.func @transform_5(%arg0: i32) -> (i32, i32) {
    %c0_i32 = arith.constant 0 : i32
    %c0_i32_0 = arith.constant 0 : i32
    %c0_i32_1 = arith.constant 0 : i32
    return %c0_i32, %c0_i32_0 : i32, i32
  }
  func.func @transform_6(%arg0: i32) -> (i32, i32) {
    %c0_i32 = arith.constant 0 : i32
    %c0_i32_0 = arith.constant 0 : i32
    return %arg0, %c0_i32 : i32, i32
  }
  func.func @transform_7(%arg0: i32) -> (i32, i32) {
    %c0_i32 = arith.constant 0 : i32
    %c0_i32_0 = arith.constant 0 : i32
    return %arg0, %c0_i32 : i32, i32
  }
  func.func @transform_8(%arg0: i32) -> (i32, i32, i32) {
    %c0_i32 = arith.constant 0 : i32
    %c0_i32_0 = arith.constant 0 : i32
    %c0_i32_1 = arith.constant 0 : i32
    return %arg0, %c0_i32, %c0_i32_0 : i32, i32, i32
  }
}

module attributes {stable_mosaic.version = 11 : i64} {
  func.func @coattention_kernel(%arg0: i32, %arg1: memref<2x16x32xf32, #tpu.memory_space<vmem>>, %arg2: memref<2x8x32xf32, #tpu.memory_space<vmem>>, %arg3: memref<32x128xf32, #tpu.memory_space<vmem>>, %arg4: memref<1x128xf32, #tpu.memory_space<vmem>>, %arg5: memref<32x128xf32, #tpu.memory_space<vmem>>, %arg6: memref<1x128xf32, #tpu.memory_space<vmem>>, %arg7: memref<2x32xf32, #tpu.memory_space<vmem>>, %arg8: memref<2x32xf32, #tpu.memory_space<vmem>>, %arg9: memref<2x16x8xf32, #tpu.memory_space<vmem>>) attributes {dimension_semantics = [#tpu.dimension_semantics<parallel>], iteration_bounds = array<i64: 1>, scalar_prefetch = 0 : i64, scratch_operands = 0 : i64, tpu.core_type = #tpu.core_type<tc>, window_params = [{transform_indices = @transform_0, window_bounds = array<i64: 2, 16, 32>}, {transform_indices = @transform_1, window_bounds = array<i64: 2, 8, 32>}, {pipeline_mode = #tpu.pipeline_mode<synchronous>, transform_indices = @transform_2, window_bounds = array<i64: 32, 128>}, {pipeline_mode = #tpu.pipeline_mode<synchronous>, transform_indices = @transform_3, window_bounds = array<i64: 1, 128>}, {pipeline_mode = #tpu.pipeline_mode<synchronous>, transform_indices = @transform_4, window_bounds = array<i64: 32, 128>}, {pipeline_mode = #tpu.pipeline_mode<synchronous>, transform_indices = @transform_5, window_bounds = array<i64: 1, 128>}, {transform_indices = @transform_6, window_bounds = array<i64: 2, 32>}, {transform_indices = @transform_7, window_bounds = array<i64: 2, 32>}, {transform_indices = @transform_8, window_bounds = array<i64: 2, 16, 8>}]} {
    %c0 = arith.constant 0 : index
    %c0_0 = arith.constant 0 : index
    %c0_1 = arith.constant 0 : index
    %0 = vector.load %arg1[%c0, %c0_0, %c0_1] : memref<2x16x32xf32, #tpu.memory_space<vmem>>, vector<2x16x32xf32>
    %c0_2 = arith.constant 0 : index
    %c0_3 = arith.constant 0 : index
    %c0_4 = arith.constant 0 : index
    %1 = vector.load %arg2[%c0_2, %c0_3, %c0_4] : memref<2x8x32xf32, #tpu.memory_space<vmem>>, vector<2x8x32xf32>
    %c0_5 = arith.constant 0 : index
    %c0_6 = arith.constant 0 : index
    %2 = vector.load %arg4[%c0_5, %c0_6] : memref<1x128xf32, #tpu.memory_space<vmem>>, vector<1x128xf32>
    %c0_7 = arith.constant 0 : index
    %c0_8 = arith.constant 0 : index
    %3 = vector.load %arg6[%c0_7, %c0_8] : memref<1x128xf32, #tpu.memory_space<vmem>>, vector<1x128xf32>
    %c0_9 = arith.constant 0 : index
    %c0_10 = arith.constant 0 : index
    %4 = vector.load %arg3[%c0_9, %c0_10] : memref<32x128xf32, #tpu.memory_space<vmem>>, vector<32x128xf32>
    %c0_11 = arith.constant 0 : index
    %c0_12 = arith.constant 0 : index
    %5 = vector.load %arg5[%c0_11, %c0_12] : memref<32x128xf32, #tpu.memory_space<vmem>>, vector<32x128xf32>
    %6 = vector.shape_cast %0 : vector<2x16x32xf32> to vector<32x32xf32>
    %7 = vector.shape_cast %1 : vector<2x8x32xf32> to vector<16x32xf32>
    %cst = arith.constant dense<0.000000e+00> : vector<32x128xf32>
    %8 = tpu.matmul %6, %4, %cst {dimension_numbers = #tpu.dot_dimension_numbers<[1], [0], [0], [1], [0, 0, 1, 1], [], []>} : vector<32x32xf32>, vector<32x128xf32>, vector<32x128xf32> -> vector<32x128xf32>
    %9 = vector.broadcast %2 : vector<1x128xf32> to vector<32x128xf32>
    %10 = arith.addf %8, %9 : vector<32x128xf32>
    %cst_13 = arith.constant 0.000000e+00 : f32
    %11 = vector.broadcast %cst_13 : f32 to vector<32x128xf32>
    %12 = arith.maximumf %10, %11 : vector<32x128xf32>
    %cst_14 = arith.constant dense<0.000000e+00> : vector<16x128xf32>
    %13 = tpu.matmul %7, %5, %cst_14 {dimension_numbers = #tpu.dot_dimension_numbers<[1], [0], [0], [1], [0, 0, 1, 1], [], []>} : vector<16x32xf32>, vector<32x128xf32>, vector<16x128xf32> -> vector<16x128xf32>
    %14 = vector.broadcast %3 : vector<1x128xf32> to vector<16x128xf32>
    %15 = arith.addf %13, %14 : vector<16x128xf32>
    %cst_15 = arith.constant 0.000000e+00 : f32
    %16 = vector.broadcast %cst_15 : f32 to vector<16x128xf32>
    %17 = arith.maximumf %15, %16 : vector<16x128xf32>
    %18 = vector.shape_cast %12 : vector<32x128xf32> to vector<2x16x128xf32>
    %19 = vector.shape_cast %17 : vector<16x128xf32> to vector<2x8x128xf32>
    %cst_16 = arith.constant dense<0.000000e+00> : vector<2x16x8xf32>
    %20 = tpu.matmul %18, %19, %cst_16 {dimension_numbers = #tpu.dot_dimension_numbers<[2], [2], [1], [1], [0, 0, 0, 1, 1, 1], [0], [0]>} : vector<2x16x128xf32>, vector<2x8x128xf32>, vector<2x16x8xf32> -> vector<2x16x8xf32>
    %c0_17 = arith.constant 0 : index
    %c0_18 = arith.constant 0 : index
    %c0_19 = arith.constant 0 : index
    %21 = vector.load %arg9[%c0_17, %c0_18, %c0_19] : memref<2x16x8xf32, #tpu.memory_space<vmem>>, vector<2x16x8xf32>
    tpu.vector_store %arg9[%c0_17, %c0_18, %c0_19], %20 {strides = array<i32>} : memref<2x16x8xf32, #tpu.memory_space<vmem>>, vector<2x16x8xf32>,
    %cst_20 = arith.constant dense<0.000000e+00> : vector<2x8xf32>
    %22 = vector.multi_reduction <add>, %20, %cst_20 [1] : vector<2x16x8xf32> to vector<2x8xf32>
    %cst_21 = arith.constant 6.250000e-02 : f32
    %23 = vector.broadcast %cst_21 : f32 to vector<2x8xf32>
    %24 = arith.mulf %22, %23 : vector<2x8xf32>
    %cst_22 = arith.constant dense<0xFF800000> : vector<2xf32>
    %25 = vector.multi_reduction <maximumf>, %24, %cst_22 [1] : vector<2x8xf32> to vector<2xf32>
    %26 = vector.shape_cast %25 : vector<2xf32> to vector<2x1xf32>
    %27 = vector.broadcast %26 : vector<2x1xf32> to vector<2x8xf32>
    %28 = arith.subf %24, %27 : vector<2x8xf32>
    %29 = math.exp %28 : vector<2x8xf32>
    %cst_23 = arith.constant dense<0.000000e+00> : vector<2xf32>
    %30 = vector.multi_reduction <add>, %29, %cst_23 [1] : vector<2x8xf32> to vector<2xf32>
    %31 = vector.shape_cast %30 : vector<2xf32> to vector<2x1xf32>
    %32 = vector.broadcast %31 : vector<2x1xf32> to vector<2x8xf32>
    %33 = arith.divf %29, %32 : vector<2x8xf32>
    %34 = vector.shape_cast %33 : vector<2x8xf32> to vector<2x8x1xf32>
    %35 = vector.broadcast %34 : vector<2x8x1xf32> to vector<2x8x32xf32>
    %36 = arith.mulf %35, %1 : vector<2x8x32xf32>
    %cst_24 = arith.constant dense<0.000000e+00> : vector<2x32xf32>
    %37 = vector.multi_reduction <add>, %36, %cst_24 [1] : vector<2x8x32xf32> to vector<2x32xf32>
    %c0_25 = arith.constant 0 : index
    %c0_26 = arith.constant 0 : index
    %38 = vector.load %arg8[%c0_25, %c0_26] : memref<2x32xf32, #tpu.memory_space<vmem>>, vector<2x32xf32>
    tpu.vector_store %arg8[%c0_25, %c0_26], %37 {strides = array<i32>} : memref<2x32xf32, #tpu.memory_space<vmem>>, vector<2x32xf32>,
    %cst_27 = arith.constant dense<0.000000e+00> : vector<2x16xf32>
    %39 = vector.multi_reduction <add>, %20, %cst_27 [2] : vector<2x16x8xf32> to vector<2x16xf32>
    %cst_28 = arith.constant 1.250000e-01 : f32
    %40 = vector.broadcast %cst_28 : f32 to vector<2x16xf32>
    %41 = arith.mulf %39, %40 : vector<2x16xf32>
    %cst_29 = arith.constant dense<0xFF800000> : vector<2xf32>
    %42 = vector.multi_reduction <maximumf>, %41, %cst_29 [1] : vector<2x16xf32> to vector<2xf32>
    %43 = vector.shape_cast %42 : vector<2xf32> to vector<2x1xf32>
    %44 = vector.broadcast %43 : vector<2x1xf32> to vector<2x16xf32>
    %45 = arith.subf %41, %44 : vector<2x16xf32>
    %46 = math.exp %45 : vector<2x16xf32>
    %cst_30 = arith.constant dense<0.000000e+00> : vector<2xf32>
    %47 = vector.multi_reduction <add>, %46, %cst_30 [1] : vector<2x16xf32> to vector<2xf32>
    %48 = vector.shape_cast %47 : vector<2xf32> to vector<2x1xf32>
    %49 = vector.broadcast %48 : vector<2x1xf32> to vector<2x16xf32>
    %50 = arith.divf %46, %49 : vector<2x16xf32>
    %51 = vector.shape_cast %50 : vector<2x16xf32> to vector<2x16x1xf32>
    %52 = vector.broadcast %51 : vector<2x16x1xf32> to vector<2x16x32xf32>
    %53 = arith.mulf %52, %0 : vector<2x16x32xf32>
    %cst_31 = arith.constant dense<0.000000e+00> : vector<2x32xf32>
    %54 = vector.multi_reduction <add>, %53, %cst_31 [1] : vector<2x16x32xf32> to vector<2x32xf32>
    %c0_32 = arith.constant 0 : index
    %c0_33 = arith.constant 0 : index
    %55 = vector.load %arg7[%c0_32, %c0_33] : memref<2x32xf32, #tpu.memory_space<vmem>>, vector<2x32xf32>
    tpu.vector_store %arg7[%c0_32, %c0_33], %54 {strides = array<i32>} : memref<2x32xf32, #tpu.memory_space<vmem>>, vector<2x32xf32>,
    return
  }
  func.func @transform_0(%arg0: i32) -> (i32, i32, i32) {
    %c0_i32 = arith.constant 0 : i32
    %c0_i32_0 = arith.constant 0 : i32
    %c0_i32_1 = arith.constant 0 : i32
    return %arg0, %c0_i32, %c0_i32_0 : i32, i32, i32
  }
  func.func @transform_1(%arg0: i32) -> (i32, i32, i32) {
    %c0_i32 = arith.constant 0 : i32
    %c0_i32_0 = arith.constant 0 : i32
    %c0_i32_1 = arith.constant 0 : i32
    return %arg0, %c0_i32, %c0_i32_0 : i32, i32, i32
  }
  func.func @transform_2(%arg0: i32) -> (i32, i32) {
    %c0_i32 = arith.constant 0 : i32
    %c0_i32_0 = arith.constant 0 : i32
    %c0_i32_1 = arith.constant 0 : i32
    return %c0_i32, %c0_i32_0 : i32, i32
  }
  func.func @transform_3(%arg0: i32) -> (i32, i32) {
    %c0_i32 = arith.constant 0 : i32
    %c0_i32_0 = arith.constant 0 : i32
    %c0_i32_1 = arith.constant 0 : i32
    return %c0_i32, %c0_i32_0 : i32, i32
  }
  func.func @transform_4(%arg0: i32) -> (i32, i32) {
    %c0_i32 = arith.constant 0 : i32
    %c0_i32_0 = arith.constant 0 : i32
    %c0_i32_1 = arith.constant 0 : i32
    return %c0_i32, %c0_i32_0 : i32, i32
  }
  func.func @transform_5(%arg0: i32) -> (i32, i32) {
    %c0_i32 = arith.constant 0 : i32
    %c0_i32_0 = arith.constant 0 : i32
    %c0_i32_1 = arith.constant 0 : i32
    return %c0_i32, %c0_i32_0 : i32, i32
  }
  func.func @transform_6(%arg0: i32) -> (i32, i32) {
    %c0_i32 = arith.constant 0 : i32
    %c0_i32_0 = arith.constant 0 : i32
    return %arg0, %c0_i32 : i32, i32
  }
  func.func @transform_7(%arg0: i32) -> (i32, i32) {
    %c0_i32 = arith.constant 0 : i32
    %c0_i32_0 = arith.constant 0 : i32
    return %arg0, %c0_i32 : i32, i32
  }
  func.func @transform_8(%arg0: i32) -> (i32, i32, i32) {
    %c0_i32 = arith.constant 0 : i32
    %c0_i32_0 = arith.constant 0 : i32
    %c0_i32_1 = arith.constant 0 : i32
    return %arg0, %c0_i32, %c0_i32_0 : i32, i32, i32
  }
}

</mosaic_0001>

<llo_original>
// kernel: tpu_custom_call.1
$region0: #{tpu_custom_call.1}
  #allocation0 [shape = 'u32[]', space=smem, size = 0x4, offset = 0x4, fixed_abs, tag = 'smem constant byte address 0x4 - core index']
  #allocation1 [shape = 'u32[72,128]{1,0:T(1,128)}', space=vmem, size = 0x9000, scoped, tag = 'internal scratch']
  %s0 = inlined_call_operand.hbm [shape: f32[2,16,32], index: 0, kind: input, shape index: {}]
  %s1 = inlined_call_operand.hbm [shape: f32[2,8,32], index: 1, kind: input, shape index: {}]
  %s2 = inlined_call_operand.hbm [shape: f32[32,128], index: 2, kind: input, shape index: {}]
  %s3 = inlined_call_operand.vmem [shape: f32[1,128], index: 3, kind: input, shape index: {}]
  %s4 = inlined_call_operand.hbm [shape: f32[32,128], index: 4, kind: input, shape index: {}]
  %s5 = inlined_call_operand.vmem [shape: f32[1,128], index: 5, kind: input, shape index: {}]
  %s6 = inlined_call_operand.hbm [shape: f32[2,32], index: 6, kind: output, shape index: {0}]
  %s7 = inlined_call_operand.hbm [shape: f32[2,32], index: 7, kind: output, shape index: {1}]
  %s8 = inlined_call_operand.vmem [shape: f32[2,16,8], index: 8, kind: output, shape index: {2}]
  %9 = xla_tuple %s6, %s7, %s8
  %s10 = sld [smem:[#allocation0]]
  $region66: #{tpu_custom_call.1} parent=0
    _
  %s12 = ssub.s32 1, %s10
  %s13 = scalar_select 0, %s12, %s10
  $region1: #{tpu_custom_call.1} parent=0
    #allocation2 [shape = 'u8[16384]{0}', space=vmem, size = 0x4000, scoped, tag = 'input window, operand 0, single buffered']
    #allocation3 [shape = 's32[1]{0}', space=sflag, size = 0x4, scoped, tag = 'scoped memory for tpu_custom_call.1']
    #allocation4 [shape = 's32[1]{0}', space=sflag, size = 0x4, scoped, tag = 'scoped memory for tpu_custom_call.1']
    #allocation5 [shape = 'u8[8192]{0}', space=vmem, size = 0x2000, scoped, tag = 'input window, operand 1, single buffered']
    #allocation6 [shape = 's32[1]{0}', space=sflag, size = 0x4, scoped, tag = 'scoped memory for tpu_custom_call.1']
    #allocation7 [shape = 'u8[16384]{0}', space=vmem, size = 0x4000, scoped, tag = 'input window, operand 2, single buffered']
    #allocation8 [shape = 'u8[16384]{0}', space=vmem, size = 0x4000, scoped, tag = 'input window, operand 4, single buffered']
    #allocation9 [shape = 's32[1]{0}', space=sflag, size = 0x4, scoped, tag = 'scoped memory for tpu_custom_call.1']
    #allocation10 [shape = 'u8[1024]{0}', space=vmem, size = 0x400, scoped, tag = 'output window, operand 0, single buffered']
    #allocation11 [shape = 'u8[1024]{0}', space=vmem, size = 0x400, scoped, tag = 'output window, operand 1, single buffered']
    #allocation12 [shape = 's32[1]{0}', space=sflag, size = 0x4, scoped, tag = 'scoped memory for tpu_custom_call.1']
    %14 = vsyncpa [#allocation3], 0
    %15 = vsyncpa [#allocation6], 0
    %16 = vsyncpa [#allocation9], 0
    %17 = vsyncpa [#allocation4], 0
    %18 = vsyncpa [#allocation12], 0
    // Predicated region
    $region2: #{tpu_custom_call.1} parent=1 // pred_check
      _
    $region3: #{tpu_custom_call.1} parent=1 // pred_check_branch
      %20 = sbr.rel (0) target = $region5
    $region4: #{tpu_custom_call.1} parent=1 // pred_region
      %22 = vsyncadd [#allocation3], 0
      %s23 = sshll.u32 %s0, 4
      %s24 = int_to_ptr.hbm [resolvable:$true] %s23
      %s25 = sshll.u32 [#allocation2], 4
      %s26 = int_to_ptr.vmem [resolvable:$true] %s25
      %31 = dma.hbm_to_vmem [thread:$0]  %s24, 512, %s26, [#allocation3], 128, 128, 8
    $region5: #{tpu_custom_call.1} parent=1 // pred_fallthru
      _
    // Predicated region
    $region6: #{tpu_custom_call.1} parent=1 // pred_check
      _
    $region7: #{tpu_custom_call.1} parent=1 // pred_check_branch
      %33 = sbr.rel (0) target = $region9
    $region8: #{tpu_custom_call.1} parent=1 // pred_region
      %35 = vsyncadd [#allocation6], 0
      %s36 = sshll.u32 %s1, 4
      %s37 = int_to_ptr.hbm [resolvable:$true] %s36
      %s38 = sshll.u32 [#allocation5], 4
      %s39 = int_to_ptr.vmem [resolvable:$true] %s38
      %44 = dma.hbm_to_vmem [thread:$0]  %s37, 256, %s39, [#allocation6], 128, 128, 8
    $region9: #{tpu_custom_call.1} parent=1 // pred_fallthru
      _
    // Predicated region
    $region10: #{tpu_custom_call.1} parent=1 // pred_check
      _
    $region11: #{tpu_custom_call.1} parent=1 // pred_check_branch
      %46 = sbr.rel (0) target = $region13
    $region12: #{tpu_custom_call.1} parent=1 // pred_region
      %48 = vsyncadd [#allocation6], 0
      %s49 = sshll.u32 %s2, 4
      %s50 = int_to_ptr.hbm [resolvable:$true] %s49
      %s51 = sshll.u32 [#allocation7], 4
      %s52 = int_to_ptr.vmem [resolvable:$true] %s51
      %57 = dma.hbm_to_vmem [thread:$0]  %s50, 512, %s52, [#allocation6], 128, 128, 8
    $region13: #{tpu_custom_call.1} parent=1 // pred_fallthru
      _
    // Predicated region
    $region14: #{tpu_custom_call.1} parent=1 // pred_check
      _
    $region15: #{tpu_custom_call.1} parent=1 // pred_check_branch
      %59 = sbr.rel (0) target = $region17
    $region16: #{tpu_custom_call.1} parent=1 // pred_region
      _
    $region17: #{tpu_custom_call.1} parent=1 // pred_fallthru
      _
    // Predicated region
    $region18: #{tpu_custom_call.1} parent=1 // pred_check
      _
    $region19: #{tpu_custom_call.1} parent=1 // pred_check_branch
      %61 = sbr.rel (0) target = $region21
    $region20: #{tpu_custom_call.1} parent=1 // pred_region
      %63 = vsyncadd [#allocation9], 0
      %s64 = sshll.u32 %s4, 4
      %s65 = int_to_ptr.hbm [resolvable:$true] %s64
      %s66 = sshll.u32 [#allocation8], 4
      %s67 = int_to_ptr.vmem [resolvable:$true] %s66
      %72 = dma.hbm_to_vmem [thread:$0]  %s65, 512, %s67, [#allocation9], 128, 128, 8
    $region21: #{tpu_custom_call.1} parent=1 // pred_fallthru
      _
    // Predicated region
    $region22: #{tpu_custom_call.1} parent=1 // pred_check
      _
    $region23: #{tpu_custom_call.1} parent=1 // pred_check_branch
      %74 = sbr.rel (0) target = $region25
    $region24: #{tpu_custom_call.1} parent=1 // pred_region
      _
    $region25: #{tpu_custom_call.1} parent=1 // pred_fallthru
      _
    // Predicated region
    $region26: #{tpu_custom_call.1} parent=1 // pred_check
      _
    $region27: #{tpu_custom_call.1} parent=1 // pred_check_branch
      %76 = sbr.rel (0) target = $region29
    $region28: #{tpu_custom_call.1} parent=1 // pred_region
      %78 = dma.done [#allocation3], 512
    $region29: #{tpu_custom_call.1} parent=1 // pred_fallthru
      _
    // Predicated region
    $region30: #{tpu_custom_call.1} parent=1 // pred_check
      _
    $region31: #{tpu_custom_call.1} parent=1 // pred_check_branch
      %80 = sbr.rel (0) target = $region33
    $region32: #{tpu_custom_call.1} parent=1 // pred_region
      %82 = dma.done [#allocation6], 256
    $region33: #{tpu_custom_call.1} parent=1 // pred_fallthru
      _
    // Predicated region
    $region34: #{tpu_custom_call.1} parent=1 // pred_check
      _
    $region35: #{tpu_custom_call.1} parent=1 // pred_check_branch
      %84 = sbr.rel (0) target = $region37
    $region36: #{tpu_custom_call.1} parent=1 // pred_region
      %86 = dma.done [#allocation6], 512
    $region37: #{tpu_custom_call.1} parent=1 // pred_fallthru
      _
    // Predicated region
    $region38: #{tpu_custom_call.1} parent=1 // pred_check
      _
    $region39: #{tpu_custom_call.1} parent=1 // pred_check_branch
      %88 = sbr.rel (0) target = $region41
    $region40: #{tpu_custom_call.1} parent=1 // pred_region
      %90 = dma.done [#allocation9], 512
    $region41: #{tpu_custom_call.1} parent=1 // pred_fallthru
      _
    %v91 = vld [vmem:[#allocation2] sm:$0xff]
    %v92 = vld [vmem:[#allocation2 + $0x8] sm:$0xff]
    %v93 = vld [vmem:[#allocation2 + $0x10] sm:$0xff]
    %v94 = vld [vmem:[#allocation2 + $0x18] sm:$0xff]
    %v95 = vld [vmem:[#allocation5] sm:$0xff]
    %v96 = vld [vmem:[#allocation5 + $0x8] sm:$0xff]
    %v97 = vld [vmem:[%s3] sm:$0x1]
    %v98 = vld [vmem:[%s5] sm:$0x1]
    %v99 = vld [vmem:[#allocation7] sm:$0xff]
    %v100 = vld [vmem:[#allocation7 + $0x8] sm:$0xff]
    %v101 = vld [vmem:[#allocation7 + $0x10] sm:$0xff]
    %v102 = vld [vmem:[#allocation7 + $0x18] sm:$0xff]
    %v103 = vld [vmem:[#allocation8] sm:$0xff]
    %v104 = vld [vmem:[#allocation8 + $0x8] sm:$0xff]
    %v105 = vld [vmem:[#allocation8 + $0x10] sm:$0xff]
    %v106 = vld [vmem:[#allocation8 + $0x18] sm:$0xff]
    %v108 = vperm.slane %v97, 0
    %vm110 = vcmask 261120
    %v112 = vsel %vm110, %v91, 0
    %v115 = vsel %vm110, %v92, 0
    %v118 = vsel %vm110, %v93, 0
    %v121 = vsel %vm110, %v94, 0
    %123 = vmatpush.msra.mxu0 0.0
    %124 = vmatpush.msra.mxu0 0.0
    %125 = vmatpush.msra.mxu0 0.0
    %126 = vmatpush.msra.mxu0 0.0
    %127 = vmatpush.msra.mxu0 0.0
    %128 = vmatpush.msra.mxu0 0.0
    %129 = vmatpush.msra.mxu0 0.0
    %130 = vmatpush.msra.mxu0 0.0
    %131 = vmatpush.msra.mxu0 0.0
    %132 = vmatpush.msra.mxu0 0.0
    %133 = vmatpush.msra.mxu0 0.0
    %134 = vmatpush.msra.mxu0 0.0
    %135 = vmatpush.msra.mxu0 %v102
    %136 = vmatpush.msra.mxu0 %v101
    %137 = vmatpush.msra.mxu0 %v100
    %138 = vmatpush.msra.mxu0 %v99
    %139 = vmatmul.f32.gmra.mxu0 %v112
    %v140 = vpop.f32.mrf.mxu0
    %v141 = vadd.f32 %v108, %v140
    %142 = vmatmul.f32.gmra.mxu0 %v115
    %v143 = vpop.f32.mrf.mxu0
    %v144 = vadd.f32 %v108, %v143
    %145 = vmatmul.f32.gmra.mxu0 %v118
    %v146 = vpop.f32.mrf.mxu0
    %v147 = vadd.f32 %v108, %v146
    %148 = vmatmul.f32.gmra.mxu0 %v121
    %v149 = vpop.f32.mrf.mxu0
    %v150 = vadd.f32 %v108, %v149
    %151 = vdwg.mxu0
    %v152 = vmax.f32 %v141, 0.0
    %v153 = vmax.f32 %v144, 0.0
    %v154 = vmax.f32 %v147, 0.0
    %v155 = vmax.f32 %v150, 0.0
    %v157 = vperm.slane %v98, 0
    %v160 = vsel %vm110, %v95, 0
    %v163 = vsel %vm110, %v96, 0
    %165 = vmatpush.msra.mxu0 0.0
    %166 = vmatpush.msra.mxu0 0.0
    %167 = vmatpush.msra.mxu0 0.0
    %168 = vmatpush.msra.mxu0 0.0
    %169 = vmatpush.msra.mxu0 0.0
    %170 = vmatpush.msra.mxu0 0.0
    %171 = vmatpush.msra.mxu0 0.0
    %172 = vmatpush.msra.mxu0 0.0
    %173 = vmatpush.msra.mxu0 0.0
    %174 = vmatpush.msra.mxu0 0.0
    %175 = vmatpush.msra.mxu0 0.0
    %176 = vmatpush.msra.mxu0 0.0
    %177 = vmatpush.msra.mxu0 %v106
    %178 = vmatpush.msra.mxu0 %v105
    %179 = vmatpush.msra.mxu0 %v104
    %180 = vmatpush.msra.mxu0 %v103
    %181 = vmatmul.f32.gmra.mxu0 %v160
    %v182 = vpop.f32.mrf.mxu0
    %v183 = vadd.f32 %v157, %v182
    %184 = vmatmul.f32.gmra.mxu0 %v163
    %v185 = vpop.f32.mrf.mxu0
    %v186 = vadd.f32 %v157, %v185
    %187 = vdwg.mxu0
    %v188 = vmax.f32 %v183, 0.0
    %v189 = vmax.f32 %v186, 0.0
    %190 = vmatpush.xpose.msra.mxu0 0.0
    %191 = vmatpush.xpose.msra.mxu0 0.0
    %192 = vmatpush.xpose.msra.mxu0 0.0
    %193 = vmatpush.xpose.msra.mxu0 0.0
    %194 = vmatpush.xpose.msra.mxu0 0.0
    %195 = vmatpush.xpose.msra.mxu0 0.0
    %196 = vmatpush.xpose.msra.mxu0 0.0
    %197 = vmatpush.xpose.msra.mxu0 0.0
    %198 = vmatpush.xpose.msra.mxu0 0.0
    %199 = vmatpush.xpose.msra.mxu0 0.0
    %200 = vmatpush.xpose.msra.mxu0 0.0
    %201 = vmatpush.xpose.msra.mxu0 0.0
    %202 = vmatpush.xpose.msra.mxu0 0.0
    %203 = vmatpush.xpose.msra.mxu0 0.0
    %204 = vmatpush.xpose.msra.mxu0 0.0
    %205 = vmatpush.xpose.msra.mxu0 %v188
    %206 = vmatmul.f32.gmra.mxu0 %v152
    %v207 = vpop.f32.mrf.mxu0
    %v208 = vadd.f32 0.0, %v207
    %209 = vmatmul.f32.gmra.mxu0 %v153
    %v210 = vpop.f32.mrf.mxu0
    %v211 = vadd.f32 0.0, %v210
    %212 = vdwg.mxu0
    %213 = vmatpush.xpose.msra.mxu0 0.0
    %214 = vmatpush.xpose.msra.mxu0 0.0
    %215 = vmatpush.xpose.msra.mxu0 0.0
    %216 = vmatpush.xpose.msra.mxu0 0.0
    %217 = vmatpush.xpose.msra.mxu0 0.0
    %218 = vmatpush.xpose.msra.mxu0 0.0
    %219 = vmatpush.xpose.msra.mxu0 0.0
    %220 = vmatpush.xpose.msra.mxu0 0.0
    %221 = vmatpush.xpose.msra.mxu0 0.0
    %222 = vmatpush.xpose.msra.mxu0 0.0
    %223 = vmatpush.xpose.msra.mxu0 0.0
    %224 = vmatpush.xpose.msra.mxu0 0.0
    %225 = vmatpush.xpose.msra.mxu0 0.0
    %226 = vmatpush.xpose.msra.mxu0 0.0
    %227 = vmatpush.xpose.msra.mxu0 0.0
    %228 = vmatpush.xpose.msra.mxu0 %v189
    %229 = vmatmul.f32.gmra.mxu0 %v154
    %v230 = vpop.f32.mrf.mxu0
    %v231 = vadd.f32 0.0, %v230
    %232 = vmatmul.f32.gmra.mxu0 %v155
    %v233 = vpop.f32.mrf.mxu0
    %v234 = vadd.f32 0.0, %v233
    %235 = vdwg.mxu0
    %vm236 = vcmask 64512
    %237 = vst.msk [vmem:[%s8] sm:$0xff] %vm236, %v208
    %238 = vst.msk [vmem:[%s8 + $0x8] sm:$0xff] %vm236, %v211
    %239 = vst.msk [vmem:[%s8 + $0x10] sm:$0xff] %vm236, %v231
    %240 = vst.msk [vmem:[%s8 + $0x18] sm:$0xff] %vm236, %v234
    %v241 = vsel %vm236, %v208, 0.0
    %v242 = vsel %vm236, %v211, 0.0
    %v243 = vadd.f32 %v241, %v242
    %v244 = vrot.slane %v243, 4
    %v245 = vadd.f32 %v243, %v244
    %v246 = vrot.slane %v245, 2
    %v247 = vadd.f32 %v245, %v246
    %v248 = vrot.slane %v247, 1
    %v249 = vadd.f32 %v247, %v248
    %v250 = vsel %vm236, %v231, 0.0
    %v251 = vsel %vm236, %v234, 0.0
    %v252 = vadd.f32 %v250, %v251
    %v253 = vrot.slane %v252, 4
    %v254 = vadd.f32 %v252, %v253
    %v255 = vrot.slane %v254, 2
    %v256 = vadd.f32 %v254, %v255
    %v257 = vrot.slane %v256, 1
    %v258 = vadd.f32 %v256, %v257
    %v259 = vmul.f32 %v249, 0.0625
    %v260 = vmul.f32 %v258, 0.0625
    %vm263 = vcmask 1041409
    %v264 = vsel %vm263, %v260, %v259
    %vm266 = vcmask 58368
    %v267 = vsel %vm266, %v264, -inf
    %268 = vmax.xlane.f32.xlu0 %v267
    %v269 = vpop.xlane.xlu0 %268
    %v271 = vrot.slane %v269, 1
    %v274 = vsub.f32 %v259, %v269
    %v275 = vsub.f32 %v260, %v271
    %v276 = vmul.f32 %v274, 1.442695
    %v277 = vpow.pop %v276
    %v278 = vmul.f32 %v275, 1.442695
    %v279 = vpow.pop %v278
    %v282 = vrot.slane %v279, 7
    %v283 = vsel %vm263, %v282, %v277
    %v285 = vsel %vm266, %v283, 0.0
    %286 = vadd.xlane.f32.xlu0 %v285
    %v287 = vpop.xlane.xlu0 %286
    %v289 = vrot.slane %v287, 1
    %v292 = vrcp.pop %v287
    %v293 = vmul.f32 %v287, %v292
    %v294 = vsub.f32 1.0, %v293
    %v295 = vmul.f32 %v292, %v294
    %v296 = vadd.f32 %v292, %v295
    %vm297 = vweird.f32 %v287
    %vm298 = vweird.f32 %v292
    %vm299 = vmor %vm297, %vm298
    %v300 = vsel %vm299, %v292, %v296
    %v301 = vand.u32 2147483647, %v287
    %vm302 = vcmp.eq.f32.partialorder %v301, 8.507059e+37
    %v303 = vand.u32 %v287, 2147483648
    %v304 = vor.u32 1.1754944e-38, %v303
    %v305 = vsel %vm302, %v304, %v300
    %v306 = vmul.f32 %v277, %v305
    %v307 = vrcp.pop %v289
    %v308 = vmul.f32 %v289, %v307
    %v309 = vsub.f32 1.0, %v308
    %v310 = vmul.f32 %v307, %v309
    %v311 = vadd.f32 %v307, %v310
    %vm312 = vweird.f32 %v289
    %vm313 = vweird.f32 %v307
    %vm314 = vmor %vm312, %vm313
    %v315 = vsel %vm314, %v307, %v311
    %v316 = vand.u32 2147483647, %v289
    %vm317 = vcmp.eq.f32.partialorder %v316, 8.507059e+37
    %v318 = vand.u32 %v289, 2147483648
    %v319 = vor.u32 1.1754944e-38, %v318
    %v320 = vsel %vm317, %v319, %v315
    %v321 = vmul.f32 %v279, %v320
    %v322 = vperm.slane %v306, 0
    %v323 = vlaneseq
    %v324 = vshrl.u32 %v323, 7
    %326 = vset.pattern.permute.xlu0 %v324
    %327 = vperm.xlu0 %326, %v322
    %v328 = vpop.permute.xlu0 %327
    %v329 = vperm.slane %v321, 0
    %v330 = vlaneseq
    %v331 = vshrl.u32 %v330, 7
    %333 = vset.pattern.permute.xlu0 %v331
    %334 = vperm.xlu0 %333, %v329
    %v335 = vpop.permute.xlu0 %334
    %v336 = vmul.f32 %v328, %v95
    %v337 = vmul.f32 %v335, %v96
    %v338 = vsel %vm110, %v336, 0.0
    %v339 = vrot.slane %v338, 4
    %v340 = vadd.f32 %v338, %v339
    %v341 = vrot.slane %v340, 2
    %v342 = vadd.f32 %v340, %v341
    %v343 = vrot.slane %v342, 1
    %v344 = vadd.f32 %v342, %v343
    %v345 = vsel %vm110, %v337, 0.0
    %v346 = vrot.slane %v345, 4
    %v347 = vadd.f32 %v345, %v346
    %v348 = vrot.slane %v347, 2
    %v349 = vadd.f32 %v347, %v348
    %v350 = vrot.slane %v349, 1
    %v351 = vadd.f32 %v349, %v350
    %v354 = vsel %vm263, %v351, %v344
    %vm356 = vcmask 254976
    %357 = vst.msk [vmem:[#allocation11] sm:$0x3] %vm356, %v354
    %358 = vadd.xlane.f32.xlu0 %v241
    %v359 = vpop.xlane.xlu0 %358
    %360 = vadd.xlane.f32.xlu0 %v242
    %v361 = vpop.xlane.xlu0 %360
    %362 = vadd.xlane.f32.xlu0 %v250
    %v363 = vpop.xlane.xlu0 %362
    %364 = vadd.xlane.f32.xlu0 %v251
    %v365 = vpop.xlane.xlu0 %364
    %v366 = vmul.f32 %v359, 0.125
    %v367 = vmul.f32 %v361, 0.125
    %v368 = vmul.f32 %v363, 0.125
    %v369 = vmul.f32 %v365, 0.125
    %v374 = vlaneseq
    %v375 = vand.u32 %v374, 127
    %v376 = vperm.slane %v366, %v375
    %v377 = vadd.s32 %v375, 4294967288
    %v378 = vperm.slane %v367, %v377
    %vm379 = vcmask 130112
    %v380 = vsel %vm379, %v378, %v376
    %v381 = vperm.slane %v368, %v375
    %v382 = vperm.slane %v369, %v377
    %v383 = vsel %vm379, %v382, %v381
    %v384 = vsel %vm263, %v383, %v380
    %vm386 = vcmask 123904
    %v387 = vsel %vm386, %v384, -inf
    %388 = vmax.xlane.f32.xlu0 %v387
    %v389 = vpop.xlane.xlu0 %388
    %v391 = vperm.slane %v389, 0
    %v392 = vperm.slane %v389, 1
    %v395 = vsub.f32 %v366, %v391
    %v396 = vsub.f32 %v367, %v391
    %v397 = vsub.f32 %v368, %v392
    %v398 = vsub.f32 %v369, %v392
    %v399 = vmul.f32 %v395, 1.442695
    %v400 = vpow.pop %v399
    %v401 = vmul.f32 %v396, 1.442695
    %v402 = vpow.pop %v401
    %v403 = vmul.f32 %v397, 1.442695
    %v404 = vpow.pop %v403
    %v405 = vmul.f32 %v398, 1.442695
    %v406 = vpow.pop %v405
    %411 = vset.pattern.permute.xlu0 0
    %412 = vperm.xlu0 %411, %v400
    %v413 = vpop.permute.xlu0 %412
    %414 = vset.pattern.permute.xlu0 0
    %415 = vperm.xlu0 %414, %v402
    %v416 = vpop.permute.xlu0 %415
    %417 = vset.pattern.permute.xlu0 0
    %418 = vperm.xlu0 %417, %v404
    %v419 = vpop.permute.xlu0 %418
    %420 = vset.pattern.permute.xlu0 0
    %421 = vperm.xlu0 %420, %v406
    %v422 = vpop.permute.xlu0 %421
    %v423 = vperm.slane %v413, %v375
    %v424 = vperm.slane %v416, %v377
    %v425 = vsel %vm379, %v424, %v423
    %v426 = vperm.slane %v419, %v375
    %v427 = vperm.slane %v422, %v377
    %v428 = vsel %vm379, %v427, %v426
    %v429 = vsel %vm263, %v428, %v425
    %v431 = vsel %vm386, %v429, 0.0
    %432 = vadd.xlane.f32.xlu0 %v431
    %v433 = vpop.xlane.xlu0 %432
    %v435 = vperm.slane %v433, 0
    %v436 = vperm.slane %v433, 1
    %v439 = vrcp.pop %v435
    %v440 = vmul.f32 %v435, %v439
    %v441 = vsub.f32 1.0, %v440
    %v442 = vmul.f32 %v439, %v441
    %v443 = vadd.f32 %v439, %v442
    %vm444 = vweird.f32 %v435
    %vm445 = vweird.f32 %v439
    %vm446 = vmor %vm444, %vm445
    %v447 = vsel %vm446, %v439, %v443
    %v448 = vand.u32 2147483647, %v435
    %vm449 = vcmp.eq.f32.partialorder %v448, 8.507059e+37
    %v450 = vand.u32 %v435, 2147483648
    %v451 = vor.u32 1.1754944e-38, %v450
    %v452 = vsel %vm449, %v451, %v447
    %v453 = vmul.f32 %v400, %v452
    %v454 = vmul.f32 %v402, %v452
    %v455 = vrcp.pop %v436
    %v456 = vmul.f32 %v436, %v455
    %v457 = vsub.f32 1.0, %v456
    %v458 = vmul.f32 %v455, %v457
    %v459 = vadd.f32 %v455, %v458
    %vm460 = vweird.f32 %v436
    %vm461 = vweird.f32 %v455
    %vm462 = vmor %vm460, %vm461
    %v463 = vsel %vm462, %v455, %v459
    %v464 = vand.u32 2147483647, %v436
    %vm465 = vcmp.eq.f32.partialorder %v464, 8.507059e+37
    %v466 = vand.u32 %v436, 2147483648
    %v467 = vor.u32 1.1754944e-38, %v466
    %v468 = vsel %vm465, %v467, %v463
    %v469 = vmul.f32 %v404, %v468
    %v470 = vmul.f32 %v406, %v468
    %472 = vset.pattern.permute.xlu0 0
    %473 = vperm.xlu0 %472, %v453
    %v474 = vpop.permute.xlu0 %473
    %477 = vset.pattern.permute.xlu0 0
    %478 = vperm.xlu0 %477, %v454
    %v479 = vpop.permute.xlu0 %478
    %482 = vset.pattern.permute.xlu0 0
    %483 = vperm.xlu0 %482, %v469
    %v484 = vpop.permute.xlu0 %483
    %487 = vset.pattern.permute.xlu0 0
    %488 = vperm.xlu0 %487, %v470
    %v489 = vpop.permute.xlu0 %488
    %v491 = vmul.f32 %v474, %v91
    %v492 = vmul.f32 %v479, %v92
    %v493 = vmul.f32 %v484, %v93
    %v494 = vmul.f32 %v489, %v94
    %v495 = vsel %vm110, %v491, 0.0
    %v496 = vsel %vm110, %v492, 0.0
    %v497 = vadd.f32 %v495, %v496
    %v498 = vrot.slane %v497, 4
    %v499 = vadd.f32 %v497, %v498
    %v500 = vrot.slane %v499, 2
    %v501 = vadd.f32 %v499, %v500
    %v502 = vrot.slane %v501, 1
    %v503 = vadd.f32 %v501, %v502
    %v504 = vsel %vm110, %v493, 0.0
    %v505 = vsel %vm110, %v494, 0.0
    %v506 = vadd.f32 %v504, %v505
    %v507 = vrot.slane %v506, 4
    %v508 = vadd.f32 %v506, %v507
    %v509 = vrot.slane %v508, 2
    %v510 = vadd.f32 %v508, %v509
    %v511 = vrot.slane %v510, 1
    %v512 = vadd.f32 %v510, %v511
    %v515 = vsel %vm263, %v512, %v503
    %517 = vst.msk [vmem:[#allocation10] sm:$0x3] %vm356, %v515
    // Predicated region
    $region42: #{tpu_custom_call.1} parent=1 // pred_check
      _
    $region43: #{tpu_custom_call.1} parent=1 // pred_check_branch
      %519 = sbr.rel (0) target = $region45
    $region44: #{tpu_custom_call.1} parent=1 // pred_region
      %521 = vsyncadd [#allocation4], 0
      %s523 = sshll.u32 [#allocation10], 4
      %s524 = int_to_ptr.vmem [resolvable:$true] %s523
      %s525 = sshll.u32 %s6, 4
      %s526 = int_to_ptr.hbm [resolvable:$true] %s525
      %528 = dma.vmem_to_hbm [thread:$0]  %s524, 32, %s526, [#allocation4]
    $region45: #{tpu_custom_call.1} parent=1 // pred_fallthru
      _
    // Predicated region
    $region46: #{tpu_custom_call.1} parent=1 // pred_check
      _
    $region47: #{tpu_custom_call.1} parent=1 // pred_check_branch
      %530 = sbr.rel (0) target = $region49
    $region48: #{tpu_custom_call.1} parent=1 // pred_region
      %532 = vsyncadd [#allocation12], 0
      %s534 = sshll.u32 [#allocation11], 4
      %s535 = int_to_ptr.vmem [resolvable:$true] %s534
      %s536 = sshll.u32 %s7, 4
      %s537 = int_to_ptr.hbm [resolvable:$true] %s536
      %539 = dma.vmem_to_hbm [thread:$0]  %s535, 32, %s537, [#allocation12]
    $region49: #{tpu_custom_call.1} parent=1 // pred_fallthru
      _
    // Predicated region
    $region50: #{tpu_custom_call.1} parent=1 // pred_check
      _
    $region51: #{tpu_custom_call.1} parent=1 // pred_check_branch
      %541 = sbr.rel (0) target = $region53
    $region52: #{tpu_custom_call.1} parent=1 // pred_region
      _
    $region53: #{tpu_custom_call.1} parent=1 // pred_fallthru
      _
    // Predicated region
    $region54: #{tpu_custom_call.1} parent=1 // pred_check
      _
    $region55: #{tpu_custom_call.1} parent=1 // pred_check_branch
      %543 = sbr.rel (0) target = $region57
    $region56: #{tpu_custom_call.1} parent=1 // pred_region
      %545 = dma.done [#allocation4], 32
    $region57: #{tpu_custom_call.1} parent=1 // pred_fallthru
      _
    // Predicated region
    $region58: #{tpu_custom_call.1} parent=1 // pred_check
      _
    $region59: #{tpu_custom_call.1} parent=1 // pred_check_branch
      %547 = sbr.rel (0) target = $region61
    $region60: #{tpu_custom_call.1} parent=1 // pred_region
      %549 = dma.done [#allocation12], 32
    $region61: #{tpu_custom_call.1} parent=1 // pred_fallthru
      _
    // Predicated region
    $region62: #{tpu_custom_call.1} parent=1 // pred_check
      _
    $region63: #{tpu_custom_call.1} parent=1 // pred_check_branch
      %551 = sbr.rel (0) target = $region65
    $region64: #{tpu_custom_call.1} parent=1 // pred_region
      _
    $region65: #{tpu_custom_call.1} parent=1 // pred_fallthru
      _
    %552 = vsyncpa [#allocation3], 1
    %553 = vsyncpa [#allocation6], 1
    %554 = vsyncpa [#allocation9], 1
    %555 = vsyncpa [#allocation4], 1
    %556 = vsyncpa [#allocation12], 1

// kernel: tpu_custom_call.1
$region0: #{tpu_custom_call.1}
  #allocation0 [shape = 'u32[]', space=smem, size = 0x4, offset = 0x4, fixed_abs, tag = 'smem constant byte address 0x4 - core index']
  #allocation1 [shape = 'u32[72,128]{1,0:T(1,128)}', space=vmem, size = 0x9000, scoped, tag = 'internal scratch']
  %s0 = inlined_call_operand.hbm [shape: f32[2,16,32], index: 0, kind: input, shape index: {}]
  %s1 = inlined_call_operand.hbm [shape: f32[2,8,32], index: 1, kind: input, shape index: {}]
  %s2 = inlined_call_operand.hbm [shape: f32[32,128], index: 2, kind: input, shape index: {}]
  %s3 = inlined_call_operand.vmem [shape: f32[1,128], index: 3, kind: input, shape index: {}]
  %s4 = inlined_call_operand.hbm [shape: f32[32,128], index: 4, kind: input, shape index: {}]
  %s5 = inlined_call_operand.vmem [shape: f32[1,128], index: 5, kind: input, shape index: {}]
  %s6 = inlined_call_operand.hbm [shape: f32[2,32], index: 6, kind: output, shape index: {0}]
  %s7 = inlined_call_operand.hbm [shape: f32[2,32], index: 7, kind: output, shape index: {1}]
  %s8 = inlined_call_operand.vmem [shape: f32[2,16,8], index: 8, kind: output, shape index: {2}]
  %9 = xla_tuple %s6, %s7, %s8
  %s10 = sld [smem:[#allocation0]]
  $region66: #{tpu_custom_call.1} parent=0
    _
  %s12 = ssub.s32 1, %s10
  %s13 = scalar_select 0, %s12, %s10
  $region1: #{tpu_custom_call.1} parent=0
    #allocation2 [shape = 'u8[16384]{0}', space=vmem, size = 0x4000, scoped, tag = 'input window, operand 0, single buffered']
    #allocation3 [shape = 's32[1]{0}', space=sflag, size = 0x4, scoped, tag = 'scoped memory for tpu_custom_call.1']
    #allocation4 [shape = 's32[1]{0}', space=sflag, size = 0x4, scoped, tag = 'scoped memory for tpu_custom_call.1']
    #allocation5 [shape = 'u8[8192]{0}', space=vmem, size = 0x2000, scoped, tag = 'input window, operand 1, single buffered']
    #allocation6 [shape = 's32[1]{0}', space=sflag, size = 0x4, scoped, tag = 'scoped memory for tpu_custom_call.1']
    #allocation7 [shape = 'u8[16384]{0}', space=vmem, size = 0x4000, scoped, tag = 'input window, operand 2, single buffered']
    #allocation8 [shape = 'u8[16384]{0}', space=vmem, size = 0x4000, scoped, tag = 'input window, operand 4, single buffered']
    #allocation9 [shape = 's32[1]{0}', space=sflag, size = 0x4, scoped, tag = 'scoped memory for tpu_custom_call.1']
    #allocation10 [shape = 'u8[1024]{0}', space=vmem, size = 0x400, scoped, tag = 'output window, operand 0, single buffered']
    #allocation11 [shape = 'u8[1024]{0}', space=vmem, size = 0x400, scoped, tag = 'output window, operand 1, single buffered']
    #allocation12 [shape = 's32[1]{0}', space=sflag, size = 0x4, scoped, tag = 'scoped memory for tpu_custom_call.1']
    %14 = vsyncpa [#allocation3], 0
    %15 = vsyncpa [#allocation6], 0
    %16 = vsyncpa [#allocation9], 0
    %17 = vsyncpa [#allocation4], 0
    %18 = vsyncpa [#allocation12], 0
    // Predicated region
    $region2: #{tpu_custom_call.1} parent=1 // pred_check
      _
    $region3: #{tpu_custom_call.1} parent=1 // pred_check_branch
      %20 = sbr.rel (0) target = $region5
    $region4: #{tpu_custom_call.1} parent=1 // pred_region
      %22 = vsyncadd [#allocation3], 0
      %s23 = sshll.u32 %s0, 4
      %s24 = int_to_ptr.hbm [resolvable:$true] %s23
      %s25 = sshll.u32 [#allocation2], 4
      %s26 = int_to_ptr.vmem [resolvable:$true] %s25
      %31 = dma.hbm_to_vmem [thread:$0]  %s24, 512, %s26, [#allocation3], 128, 128, 8
    $region5: #{tpu_custom_call.1} parent=1 // pred_fallthru
      _
    // Predicated region
    $region6: #{tpu_custom_call.1} parent=1 // pred_check
      _
    $region7: #{tpu_custom_call.1} parent=1 // pred_check_branch
      %33 = sbr.rel (0) target = $region9
    $region8: #{tpu_custom_call.1} parent=1 // pred_region
      %35 = vsyncadd [#allocation6], 0
      %s36 = sshll.u32 %s1, 4
      %s37 = int_to_ptr.hbm [resolvable:$true] %s36
      %s38 = sshll.u32 [#allocation5], 4
      %s39 = int_to_ptr.vmem [resolvable:$true] %s38
      %44 = dma.hbm_to_vmem [thread:$0]  %s37, 256, %s39, [#allocation6], 128, 128, 8
    $region9: #{tpu_custom_call.1} parent=1 // pred_fallthru
      _
    // Predicated region
    $region10: #{tpu_custom_call.1} parent=1 // pred_check
      _
    $region11: #{tpu_custom_call.1} parent=1 // pred_check_branch
      %46 = sbr.rel (0) target = $region13
    $region12: #{tpu_custom_call.1} parent=1 // pred_region
      %48 = vsyncadd [#allocation6], 0
      %s49 = sshll.u32 %s2, 4
      %s50 = int_to_ptr.hbm [resolvable:$true] %s49
      %s51 = sshll.u32 [#allocation7], 4
      %s52 = int_to_ptr.vmem [resolvable:$true] %s51
      %57 = dma.hbm_to_vmem [thread:$0]  %s50, 512, %s52, [#allocation6], 128, 128, 8
    $region13: #{tpu_custom_call.1} parent=1 // pred_fallthru
      _
    // Predicated region
    $region14: #{tpu_custom_call.1} parent=1 // pred_check
      _
    $region15: #{tpu_custom_call.1} parent=1 // pred_check_branch
      %59 = sbr.rel (0) target = $region17
    $region16: #{tpu_custom_call.1} parent=1 // pred_region
      _
    $region17: #{tpu_custom_call.1} parent=1 // pred_fallthru
      _
    // Predicated region
    $region18: #{tpu_custom_call.1} parent=1 // pred_check
      _
    $region19: #{tpu_custom_call.1} parent=1 // pred_check_branch
      %61 = sbr.rel (0) target = $region21
    $region20: #{tpu_custom_call.1} parent=1 // pred_region
      %63 = vsyncadd [#allocation9], 0
      %s64 = sshll.u32 %s4, 4
      %s65 = int_to_ptr.hbm [resolvable:$true] %s64
      %s66 = sshll.u32 [#allocation8], 4
      %s67 = int_to_ptr.vmem [resolvable:$true] %s66
      %72 = dma.hbm_to_vmem [thread:$0]  %s65, 512, %s67, [#allocation9], 128, 128, 8
    $region21: #{tpu_custom_call.1} parent=1 // pred_fallthru
      _
    // Predicated region
    $region22: #{tpu_custom_call.1} parent=1 // pred_check
      _
    $region23: #{tpu_custom_call.1} parent=1 // pred_check_branch
      %74 = sbr.rel (0) target = $region25
    $region24: #{tpu_custom_call.1} parent=1 // pred_region
      _
    $region25: #{tpu_custom_call.1} parent=1 // pred_fallthru
      _
    // Predicated region
    $region26: #{tpu_custom_call.1} parent=1 // pred_check
      _
    $region27: #{tpu_custom_call.1} parent=1 // pred_check_branch
      %76 = sbr.rel (0) target = $region29
    $region28: #{tpu_custom_call.1} parent=1 // pred_region
      %78 = dma.done [#allocation3], 512
    $region29: #{tpu_custom_call.1} parent=1 // pred_fallthru
      _
    // Predicated region
    $region30: #{tpu_custom_call.1} parent=1 // pred_check
      _
    $region31: #{tpu_custom_call.1} parent=1 // pred_check_branch
      %80 = sbr.rel (0) target = $region33
    $region32: #{tpu_custom_call.1} parent=1 // pred_region
      %82 = dma.done [#allocation6], 256
    $region33: #{tpu_custom_call.1} parent=1 // pred_fallthru
      _
    // Predicated region
    $region34: #{tpu_custom_call.1} parent=1 // pred_check
      _
    $region35: #{tpu_custom_call.1} parent=1 // pred_check_branch
      %84 = sbr.rel (0) target = $region37
    $region36: #{tpu_custom_call.1} parent=1 // pred_region
      %86 = dma.done [#allocation6], 512
    $region37: #{tpu_custom_call.1} parent=1 // pred_fallthru
      _
    // Predicated region
    $region38: #{tpu_custom_call.1} parent=1 // pred_check
      _
    $region39: #{tpu_custom_call.1} parent=1 // pred_check_branch
      %88 = sbr.rel (0) target = $region41
    $region40: #{tpu_custom_call.1} parent=1 // pred_region
      %90 = dma.done [#allocation9], 512
    $region41: #{tpu_custom_call.1} parent=1 // pred_fallthru
      _
    %v91 = vld [vmem:[#allocation2] sm:$0xff]
    %v92 = vld [vmem:[#allocation2 + $0x8] sm:$0xff]
    %v93 = vld [vmem:[#allocation2 + $0x10] sm:$0xff]
    %v94 = vld [vmem:[#allocation2 + $0x18] sm:$0xff]
    %v95 = vld [vmem:[#allocation5] sm:$0xff]
    %v96 = vld [vmem:[#allocation5 + $0x8] sm:$0xff]
    %v97 = vld [vmem:[%s3] sm:$0x1]
    %v98 = vld [vmem:[%s5] sm:$0x1]
    %v99 = vld [vmem:[#allocation7] sm:$0xff]
    %v100 = vld [vmem:[#allocation7 + $0x8] sm:$0xff]
    %v101 = vld [vmem:[#allocation7 + $0x10] sm:$0xff]
    %v102 = vld [vmem:[#allocation7 + $0x18] sm:$0xff]
    %v103 = vld [vmem:[#allocation8] sm:$0xff]
    %v104 = vld [vmem:[#allocation8 + $0x8] sm:$0xff]
    %v105 = vld [vmem:[#allocation8 + $0x10] sm:$0xff]
    %v106 = vld [vmem:[#allocation8 + $0x18] sm:$0xff]
    %v108 = vperm.slane %v97, 0
    %vm110 = vcmask 261120
    %v112 = vsel %vm110, %v91, 0
    %v115 = vsel %vm110, %v92, 0
    %v118 = vsel %vm110, %v93, 0
    %v121 = vsel %vm110, %v94, 0
    %123 = vmatpush.msra.mxu0 0.0
    %124 = vmatpush.msra.mxu0 0.0
    %125 = vmatpush.msra.mxu0 0.0
    %126 = vmatpush.msra.mxu0 0.0
    %127 = vmatpush.msra.mxu0 0.0
    %128 = vmatpush.msra.mxu0 0.0
    %129 = vmatpush.msra.mxu0 0.0
    %130 = vmatpush.msra.mxu0 0.0
    %131 = vmatpush.msra.mxu0 0.0
    %132 = vmatpush.msra.mxu0 0.0
    %133 = vmatpush.msra.mxu0 0.0
    %134 = vmatpush.msra.mxu0 0.0
    %135 = vmatpush.msra.mxu0 %v102
    %136 = vmatpush.msra.mxu0 %v101
    %137 = vmatpush.msra.mxu0 %v100
    %138 = vmatpush.msra.mxu0 %v99
    %139 = vmatmul.f32.gmra.mxu0 %v112
    %v140 = vpop.f32.mrf.mxu0
    %v141 = vadd.f32 %v108, %v140
    %142 = vmatmul.f32.gmra.mxu0 %v115
    %v143 = vpop.f32.mrf.mxu0
    %v144 = vadd.f32 %v108, %v143
    %145 = vmatmul.f32.gmra.mxu0 %v118
    %v146 = vpop.f32.mrf.mxu0
    %v147 = vadd.f32 %v108, %v146
    %148 = vmatmul.f32.gmra.mxu0 %v121
    %v149 = vpop.f32.mrf.mxu0
    %v150 = vadd.f32 %v108, %v149
    %151 = vdwg.mxu0
    %v152 = vmax.f32 %v141, 0.0
    %v153 = vmax.f32 %v144, 0.0
    %v154 = vmax.f32 %v147, 0.0
    %v155 = vmax.f32 %v150, 0.0
    %v157 = vperm.slane %v98, 0
    %v160 = vsel %vm110, %v95, 0
    %v163 = vsel %vm110, %v96, 0
    %165 = vmatpush.msra.mxu0 0.0
    %166 = vmatpush.msra.mxu0 0.0
    %167 = vmatpush.msra.mxu0 0.0
    %168 = vmatpush.msra.mxu0 0.0
    %169 = vmatpush.msra.mxu0 0.0
    %170 = vmatpush.msra.mxu0 0.0
    %171 = vmatpush.msra.mxu0 0.0
    %172 = vmatpush.msra.mxu0 0.0
    %173 = vmatpush.msra.mxu0 0.0
    %174 = vmatpush.msra.mxu0 0.0
    %175 = vmatpush.msra.mxu0 0.0
    %176 = vmatpush.msra.mxu0 0.0
    %177 = vmatpush.msra.mxu0 %v106
    %178 = vmatpush.msra.mxu0 %v105
    %179 = vmatpush.msra.mxu0 %v104
    %180 = vmatpush.msra.mxu0 %v103
    %181 = vmatmul.f32.gmra.mxu0 %v160
    %v182 = vpop.f32.mrf.mxu0
    %v183 = vadd.f32 %v157, %v182
    %184 = vmatmul.f32.gmra.mxu0 %v163
    %v185 = vpop.f32.mrf.mxu0
    %v186 = vadd.f32 %v157, %v185
    %187 = vdwg.mxu0
    %v188 = vmax.f32 %v183, 0.0
    %v189 = vmax.f32 %v186, 0.0
    %190 = vmatpush.xpose.msra.mxu0 0.0
    %191 = vmatpush.xpose.msra.mxu0 0.0
    %192 = vmatpush.xpose.msra.mxu0 0.0
    %193 = vmatpush.xpose.msra.mxu0 0.0
    %194 = vmatpush.xpose.msra.mxu0 0.0
    %195 = vmatpush.xpose.msra.mxu0 0.0
    %196 = vmatpush.xpose.msra.mxu0 0.0
    %197 = vmatpush.xpose.msra.mxu0 0.0
    %198 = vmatpush.xpose.msra.mxu0 0.0
    %199 = vmatpush.xpose.msra.mxu0 0.0
    %200 = vmatpush.xpose.msra.mxu0 0.0
    %201 = vmatpush.xpose.msra.mxu0 0.0
    %202 = vmatpush.xpose.msra.mxu0 0.0
    %203 = vmatpush.xpose.msra.mxu0 0.0
    %204 = vmatpush.xpose.msra.mxu0 0.0
    %205 = vmatpush.xpose.msra.mxu0 %v188
    %206 = vmatmul.f32.gmra.mxu0 %v152
    %v207 = vpop.f32.mrf.mxu0
    %v208 = vadd.f32 0.0, %v207
    %209 = vmatmul.f32.gmra.mxu0 %v153
    %v210 = vpop.f32.mrf.mxu0
    %v211 = vadd.f32 0.0, %v210
    %212 = vdwg.mxu0
    %213 = vmatpush.xpose.msra.mxu0 0.0
    %214 = vmatpush.xpose.msra.mxu0 0.0
    %215 = vmatpush.xpose.msra.mxu0 0.0
    %216 = vmatpush.xpose.msra.mxu0 0.0
    %217 = vmatpush.xpose.msra.mxu0 0.0
    %218 = vmatpush.xpose.msra.mxu0 0.0
    %219 = vmatpush.xpose.msra.mxu0 0.0
    %220 = vmatpush.xpose.msra.mxu0 0.0
    %221 = vmatpush.xpose.msra.mxu0 0.0
    %222 = vmatpush.xpose.msra.mxu0 0.0
    %223 = vmatpush.xpose.msra.mxu0 0.0
    %224 = vmatpush.xpose.msra.mxu0 0.0
    %225 = vmatpush.xpose.msra.mxu0 0.0
    %226 = vmatpush.xpose.msra.mxu0 0.0
    %227 = vmatpush.xpose.msra.mxu0 0.0
    %228 = vmatpush.xpose.msra.mxu0 %v189
    %229 = vmatmul.f32.gmra.mxu0 %v154
    %v230 = vpop.f32.mrf.mxu0
    %v231 = vadd.f32 0.0, %v230
    %232 = vmatmul.f32.gmra.mxu0 %v155
    %v233 = vpop.f32.mrf.mxu0
    %v234 = vadd.f32 0.0, %v233
    %235 = vdwg.mxu0
    %vm236 = vcmask 64512
    %237 = vst.msk [vmem:[%s8] sm:$0xff] %vm236, %v208
    %238 = vst.msk [vmem:[%s8 + $0x8] sm:$0xff] %vm236, %v211
    %239 = vst.msk [vmem:[%s8 + $0x10] sm:$0xff] %vm236, %v231
    %240 = vst.msk [vmem:[%s8 + $0x18] sm:$0xff] %vm236, %v234
    %v241 = vsel %vm236, %v208, 0.0
    %v242 = vsel %vm236, %v211, 0.0
    %v243 = vadd.f32 %v241, %v242
    %v244 = vrot.slane %v243, 4
    %v245 = vadd.f32 %v243, %v244
    %v246 = vrot.slane %v245, 2
    %v247 = vadd.f32 %v245, %v246
    %v248 = vrot.slane %v247, 1
    %v249 = vadd.f32 %v247, %v248
    %v250 = vsel %vm236, %v231, 0.0
    %v251 = vsel %vm236, %v234, 0.0
    %v252 = vadd.f32 %v250, %v251
    %v253 = vrot.slane %v252, 4
    %v254 = vadd.f32 %v252, %v253
    %v255 = vrot.slane %v254, 2
    %v256 = vadd.f32 %v254, %v255
    %v257 = vrot.slane %v256, 1
    %v258 = vadd.f32 %v256, %v257
    %v259 = vmul.f32 %v249, 0.0625
    %v260 = vmul.f32 %v258, 0.0625
    %vm263 = vcmask 1041409
    %v264 = vsel %vm263, %v260, %v259
    %vm266 = vcmask 58368
    %v267 = vsel %vm266, %v264, -inf
    %268 = vmax.xlane.f32.xlu0 %v267
    %v269 = vpop.xlane.xlu0 %268
    %v271 = vrot.slane %v269, 1
    %v274 = vsub.f32 %v259, %v269
    %v275 = vsub.f32 %v260, %v271
    %v276 = vmul.f32 %v274, 1.442695
    %v277 = vpow.pop %v276
    %v278 = vmul.f32 %v275, 1.442695
    %v279 = vpow.pop %v278
    %v282 = vrot.slane %v279, 7
    %v283 = vsel %vm263, %v282, %v277
    %v285 = vsel %vm266, %v283, 0.0
    %286 = vadd.xlane.f32.xlu0 %v285
    %v287 = vpop.xlane.xlu0 %286
    %v289 = vrot.slane %v287, 1
    %v292 = vrcp.pop %v287
    %v293 = vmul.f32 %v287, %v292
    %v294 = vsub.f32 1.0, %v293
    %v295 = vmul.f32 %v292, %v294
    %v296 = vadd.f32 %v292, %v295
    %vm297 = vweird.f32 %v287
    %vm298 = vweird.f32 %v292
    %vm299 = vmor %vm297, %vm298
    %v300 = vsel %vm299, %v292, %v296
    %v301 = vand.u32 2147483647, %v287
    %vm302 = vcmp.eq.f32.partialorder %v301, 8.507059e+37
    %v303 = vand.u32 %v287, 2147483648
    %v304 = vor.u32 1.1754944e-38, %v303
    %v305 = vsel %vm302, %v304, %v300
    %v306 = vmul.f32 %v277, %v305
    %v307 = vrcp.pop %v289
    %v308 = vmul.f32 %v289, %v307
    %v309 = vsub.f32 1.0, %v308
    %v310 = vmul.f32 %v307, %v309
    %v311 = vadd.f32 %v307, %v310
    %vm312 = vweird.f32 %v289
    %vm313 = vweird.f32 %v307
    %vm314 = vmor %vm312, %vm313
    %v315 = vsel %vm314, %v307, %v311
    %v316 = vand.u32 2147483647, %v289
    %vm317 = vcmp.eq.f32.partialorder %v316, 8.507059e+37
    %v318 = vand.u32 %v289, 2147483648
    %v319 = vor.u32 1.1754944e-38, %v318
    %v320 = vsel %vm317, %v319, %v315
    %v321 = vmul.f32 %v279, %v320
    %v322 = vperm.slane %v306, 0
    %v323 = vlaneseq
    %v324 = vshrl.u32 %v323, 7
    %326 = vset.pattern.permute.xlu0 %v324
    %327 = vperm.xlu0 %326, %v322
    %v328 = vpop.permute.xlu0 %327
    %v329 = vperm.slane %v321, 0
    %v330 = vlaneseq
    %v331 = vshrl.u32 %v330, 7
    %333 = vset.pattern.permute.xlu0 %v331
    %334 = vperm.xlu0 %333, %v329
    %v335 = vpop.permute.xlu0 %334
    %v336 = vmul.f32 %v328, %v95
    %v337 = vmul.f32 %v335, %v96
    %v338 = vsel %vm110, %v336, 0.0
    %v339 = vrot.slane %v338, 4
    %v340 = vadd.f32 %v338, %v339
    %v341 = vrot.slane %v340, 2
    %v342 = vadd.f32 %v340, %v341
    %v343 = vrot.slane %v342, 1
    %v344 = vadd.f32 %v342, %v343
    %v345 = vsel %vm110, %v337, 0.0
    %v346 = vrot.slane %v345, 4
    %v347 = vadd.f32 %v345, %v346
    %v348 = vrot.slane %v347, 2
    %v349 = vadd.f32 %v347, %v348
    %v350 = vrot.slane %v349, 1
    %v351 = vadd.f32 %v349, %v350
    %v354 = vsel %vm263, %v351, %v344
    %vm356 = vcmask 254976
    %357 = vst.msk [vmem:[#allocation11] sm:$0x3] %vm356, %v354
    %358 = vadd.xlane.f32.xlu0 %v241
    %v359 = vpop.xlane.xlu0 %358
    %360 = vadd.xlane.f32.xlu0 %v242
    %v361 = vpop.xlane.xlu0 %360
    %362 = vadd.xlane.f32.xlu0 %v250
    %v363 = vpop.xlane.xlu0 %362
    %364 = vadd.xlane.f32.xlu0 %v251
    %v365 = vpop.xlane.xlu0 %364
    %v366 = vmul.f32 %v359, 0.125
    %v367 = vmul.f32 %v361, 0.125
    %v368 = vmul.f32 %v363, 0.125
    %v369 = vmul.f32 %v365, 0.125
    %v374 = vlaneseq
    %v375 = vand.u32 %v374, 127
    %v376 = vperm.slane %v366, %v375
    %v377 = vadd.s32 %v375, 4294967288
    %v378 = vperm.slane %v367, %v377
    %vm379 = vcmask 130112
    %v380 = vsel %vm379, %v378, %v376
    %v381 = vperm.slane %v368, %v375
    %v382 = vperm.slane %v369, %v377
    %v383 = vsel %vm379, %v382, %v381
    %v384 = vsel %vm263, %v383, %v380
    %vm386 = vcmask 123904
    %v387 = vsel %vm386, %v384, -inf
    %388 = vmax.xlane.f32.xlu0 %v387
    %v389 = vpop.xlane.xlu0 %388
    %v391 = vperm.slane %v389, 0
    %v392 = vperm.slane %v389, 1
    %v395 = vsub.f32 %v366, %v391
    %v396 = vsub.f32 %v367, %v391
    %v397 = vsub.f32 %v368, %v392
    %v398 = vsub.f32 %v369, %v392
    %v399 = vmul.f32 %v395, 1.442695
    %v400 = vpow.pop %v399
    %v401 = vmul.f32 %v396, 1.442695
    %v402 = vpow.pop %v401
    %v403 = vmul.f32 %v397, 1.442695
    %v404 = vpow.pop %v403
    %v405 = vmul.f32 %v398, 1.442695
    %v406 = vpow.pop %v405
    %411 = vset.pattern.permute.xlu0 0
    %412 = vperm.xlu0 %411, %v400
    %v413 = vpop.permute.xlu0 %412
    %414 = vset.pattern.permute.xlu0 0
    %415 = vperm.xlu0 %414, %v402
    %v416 = vpop.permute.xlu0 %415
    %417 = vset.pattern.permute.xlu0 0
    %418 = vperm.xlu0 %417, %v404
    %v419 = vpop.permute.xlu0 %418
    %420 = vset.pattern.permute.xlu0 0
    %421 = vperm.xlu0 %420, %v406
    %v422 = vpop.permute.xlu0 %421
    %v423 = vperm.slane %v413, %v375
    %v424 = vperm.slane %v416, %v377
    %v425 = vsel %vm379, %v424, %v423
    %v426 = vperm.slane %v419, %v375
    %v427 = vperm.slane %v422, %v377
    %v428 = vsel %vm379, %v427, %v426
    %v429 = vsel %vm263, %v428, %v425
    %v431 = vsel %vm386, %v429, 0.0
    %432 = vadd.xlane.f32.xlu0 %v431
    %v433 = vpop.xlane.xlu0 %432
    %v435 = vperm.slane %v433, 0
    %v436 = vperm.slane %v433, 1
    %v439 = vrcp.pop %v435
    %v440 = vmul.f32 %v435, %v439
    %v441 = vsub.f32 1.0, %v440
    %v442 = vmul.f32 %v439, %v441
    %v443 = vadd.f32 %v439, %v442
    %vm444 = vweird.f32 %v435
    %vm445 = vweird.f32 %v439
    %vm446 = vmor %vm444, %vm445
    %v447 = vsel %vm446, %v439, %v443
    %v448 = vand.u32 2147483647, %v435
    %vm449 = vcmp.eq.f32.partialorder %v448, 8.507059e+37
    %v450 = vand.u32 %v435, 2147483648
    %v451 = vor.u32 1.1754944e-38, %v450
    %v452 = vsel %vm449, %v451, %v447
    %v453 = vmul.f32 %v400, %v452
    %v454 = vmul.f32 %v402, %v452
    %v455 = vrcp.pop %v436
    %v456 = vmul.f32 %v436, %v455
    %v457 = vsub.f32 1.0, %v456
    %v458 = vmul.f32 %v455, %v457
    %v459 = vadd.f32 %v455, %v458
    %vm460 = vweird.f32 %v436
    %vm461 = vweird.f32 %v455
    %vm462 = vmor %vm460, %vm461
    %v463 = vsel %vm462, %v455, %v459
    %v464 = vand.u32 2147483647, %v436
    %vm465 = vcmp.eq.f32.partialorder %v464, 8.507059e+37
    %v466 = vand.u32 %v436, 2147483648
    %v467 = vor.u32 1.1754944e-38, %v466
    %v468 = vsel %vm465, %v467, %v463
    %v469 = vmul.f32 %v404, %v468
    %v470 = vmul.f32 %v406, %v468
    %472 = vset.pattern.permute.xlu0 0
    %473 = vperm.xlu0 %472, %v453
    %v474 = vpop.permute.xlu0 %473
    %477 = vset.pattern.permute.xlu0 0
    %478 = vperm.xlu0 %477, %v454
    %v479 = vpop.permute.xlu0 %478
    %482 = vset.pattern.permute.xlu0 0
    %483 = vperm.xlu0 %482, %v469
    %v484 = vpop.permute.xlu0 %483
    %487 = vset.pattern.permute.xlu0 0
    %488 = vperm.xlu0 %487, %v470
    %v489 = vpop.permute.xlu0 %488
    %v491 = vmul.f32 %v474, %v91
    %v492 = vmul.f32 %v479, %v92
    %v493 = vmul.f32 %v484, %v93
    %v494 = vmul.f32 %v489, %v94
    %v495 = vsel %vm110, %v491, 0.0
    %v496 = vsel %vm110, %v492, 0.0
    %v497 = vadd.f32 %v495, %v496
    %v498 = vrot.slane %v497, 4
    %v499 = vadd.f32 %v497, %v498
    %v500 = vrot.slane %v499, 2
    %v501 = vadd.f32 %v499, %v500
    %v502 = vrot.slane %v501, 1
    %v503 = vadd.f32 %v501, %v502
    %v504 = vsel %vm110, %v493, 0.0
    %v505 = vsel %vm110, %v494, 0.0
    %v506 = vadd.f32 %v504, %v505
    %v507 = vrot.slane %v506, 4
    %v508 = vadd.f32 %v506, %v507
    %v509 = vrot.slane %v508, 2
    %v510 = vadd.f32 %v508, %v509
    %v511 = vrot.slane %v510, 1
    %v512 = vadd.f32 %v510, %v511
    %v515 = vsel %vm263, %v512, %v503
    %517 = vst.msk [vmem:[#allocation10] sm:$0x3] %vm356, %v515
    // Predicated region
    $region42: #{tpu_custom_call.1} parent=1 // pred_check
      _
    $region43: #{tpu_custom_call.1} parent=1 // pred_check_branch
      %519 = sbr.rel (0) target = $region45
    $region44: #{tpu_custom_call.1} parent=1 // pred_region
      %521 = vsyncadd [#allocation4], 0
      %s523 = sshll.u32 [#allocation10], 4
      %s524 = int_to_ptr.vmem [resolvable:$true] %s523
      %s525 = sshll.u32 %s6, 4
      %s526 = int_to_ptr.hbm [resolvable:$true] %s525
      %528 = dma.vmem_to_hbm [thread:$0]  %s524, 32, %s526, [#allocation4]
    $region45: #{tpu_custom_call.1} parent=1 // pred_fallthru
      _
    // Predicated region
    $region46: #{tpu_custom_call.1} parent=1 // pred_check
      _
    $region47: #{tpu_custom_call.1} parent=1 // pred_check_branch
      %530 = sbr.rel (0) target = $region49
    $region48: #{tpu_custom_call.1} parent=1 // pred_region
      %532 = vsyncadd [#allocation12], 0
      %s534 = sshll.u32 [#allocation11], 4
      %s535 = int_to_ptr.vmem [resolvable:$true] %s534
      %s536 = sshll.u32 %s7, 4
      %s537 = int_to_ptr.hbm [resolvable:$true] %s536
      %539 = dma.vmem_to_hbm [thread:$0]  %s535, 32, %s537, [#allocation12]
    $region49: #{tpu_custom_call.1} parent=1 // pred_fallthru
      _
    // Predicated region
    $region50: #{tpu_custom_call.1} parent=1 // pred_check
      _
    $region51: #{tpu_custom_call.1} parent=1 // pred_check_branch
      %541 = sbr.rel (0) target = $region53
    $region52: #{tpu_custom_call.1} parent=1 // pred_region
      _
    $region53: #{tpu_custom_call.1} parent=1 // pred_fallthru
      _
    // Predicated region
    $region54: #{tpu_custom_call.1} parent=1 // pred_check
      _
    $region55: #{tpu_custom_call.1} parent=1 // pred_check_branch
      %543 = sbr.rel (0) target = $region57
    $region56: #{tpu_custom_call.1} parent=1 // pred_region
      %545 = dma.done [#allocation4], 32
    $region57: #{tpu_custom_call.1} parent=1 // pred_fallthru
      _
    // Predicated region
    $region58: #{tpu_custom_call.1} parent=1 // pred_check
      _
    $region59: #{tpu_custom_call.1} parent=1 // pred_check_branch
      %547 = sbr.rel (0) target = $region61
    $region60: #{tpu_custom_call.1} parent=1 // pred_region
      %549 = dma.done [#allocation12], 32
    $region61: #{tpu_custom_call.1} parent=1 // pred_fallthru
      _
    // Predicated region
    $region62: #{tpu_custom_call.1} parent=1 // pred_check
      _
    $region63: #{tpu_custom_call.1} parent=1 // pred_check_branch
      %551 = sbr.rel (0) target = $region65
    $region64: #{tpu_custom_call.1} parent=1 // pred_region
      _
    $region65: #{tpu_custom_call.1} parent=1 // pred_fallthru
      _
    %552 = vsyncpa [#allocation3], 1
    %553 = vsyncpa [#allocation6], 1
    %554 = vsyncpa [#allocation9], 1
    %555 = vsyncpa [#allocation4], 1
    %556 = vsyncpa [#allocation12], 1

</llo_original>
